<compile_context>
chip_gen: v7x
topology: tpu7x:2x2x1
jax: 0.10.0
libtpu: 0.0.40
codegen_flags: <defaults>
</compile_context>

<pallas_src>
import functools

import jax
import jax.numpy as jnp
from jax.experimental import pallas as pl
from jax.experimental.pallas import tpu as pltpu


def _half_sigmoid(x):
    # sigmoid(z) = 0.5*tanh(z/2) + 0.5; the 0.5 input scale is pre-folded into
    # the i/f/o weight rows on the host, so only one EUP push (tanh) plus one
    # VPU mul/add remain here.
    return 0.5 * jnp.tanh(x) + 0.5


def _forecaster_kernel(context, horizon, use_vpu_gates,
                       x_ref,
                       w_xg_ref, w_eh_ref, b_e_ref,
                       w_dh_ref, b_d_ref,
                       w_read_ref, b_read_ref,
                       out_ref):
    """One grid step == one pixel tile; the full time recurrence runs in-kernel."""
    C = w_eh_ref.shape[1]
    tile_n = x_ref.shape[-1]

    # Tiny weights: load once, keep vreg-resident across the whole recurrence.
    w_xg = w_xg_ref[...]      # (4C, 1)  init conv folded into encoder x-gate weights
    w_eh = w_eh_ref[...]      # (4C, C)
    b_e = b_e_ref[...]        # (4C, 1)  init-conv bias folded in
    w_dh = w_dh_ref[...]      # (4C, C)
    b_d = b_d_ref[...]        # (4C, 1)
    w_read = w_read_ref[...]  # (C, 1)
    b_read = b_read_ref[...]  # (1, 1)

    def gate_matmul(w, h):
        # TODO(synk): flip use_vpu_gates=True only after a bundle dump shows the
        # (4C,C)@(C,tile_n) MXU push/pop latency dominating VALU on the target chip.
        if use_vpu_gates:
            acc = w[:, 0:1] * h[0:1, :]
            for k in range(1, C):
                acc = acc + w[:, k:k + 1] * h[k:k + 1, :]
            return acc
        return jnp.dot(w, h, preferred_element_type=jnp.float32)

    def cell(gates, c):
        i_g = _half_sigmoid(gates[0:C])
        f_g = _half_sigmoid(gates[C:2 * C])
        g_g = jnp.tanh(gates[2 * C:3 * C])
        o_g = _half_sigmoid(gates[3 * C:4 * C])
        c_new = f_g * c + i_g * g_g
        h_new = o_g * jnp.tanh(c_new)
        return h_new, c_new

    h0 = jnp.zeros((C, tile_n), jnp.float32)
    c0 = jnp.zeros((C, tile_n), jnp.float32)

    # ---- encoder: gates = (w_ex @ w_init) * x_t + w_eh @ h + folded bias ----
    def enc_step(t, carry):
        h, c = carry
        x_t = x_ref[pl.ds(t, 1), :]                        # (1, tile_n)
        gates = w_xg * x_t + gate_matmul(w_eh, h) + b_e    # (4C, tile_n)
        return cell(gates, c)

    enc_unroll = True if context <= 16 else 4
    h, c = jax.lax.fori_loop(0, context, enc_step, (h0, c0), unroll=enc_unroll)

    # ---- decoder (x_channels == 0 -> gates from h only) + readout ----
    def readout(h):
        # (1,C)@(C,N) readout as broadcast-mul + sublane reduce (VPU/XLU, no MXU push).
        return _half_sigmoid(jnp.sum(w_read * h, axis=0, keepdims=True) + b_read)

    if horizon <= 32:
        # Keep readout rows in registers, one dense (horizon, tile_n) store at the end.
        ys = []
        for _ in range(horizon):
            gates = gate_matmul(w_dh, h) + b_d
            h, c = cell(gates, c)
            ys.append(readout(h))
        out_ref[...] = jnp.concatenate(ys, axis=0)
    else:
        def dec_step(t, carry):
            h, c = carry
            gates = gate_matmul(w_dh, h) + b_d
            h, c = cell(gates, c)
            out_ref[pl.ds(t, 1), :] = readout(h)
            return (h, c)
        jax.lax.fori_loop(0, horizon, dec_step, (h, c), unroll=4)


def _choose_tiling(n, c, max_tile_cap=1024, vreg_budget_bytes=256 * 1024):
    """Pick a lane tile size bounded by the 64x4KiB vreg file (≈8C live f32 rows
    per step) and make the number of pixel tiles >=2 and even so the "parallel"
    axis can shard across v7x's two TensorCores (near-no-op on v5e/v6e)."""
    rup = lambda v, m: -(-v // m) * m
    bytes_per_col = 8 * c * 4                    # 2C carries + 4C gates + ~2C temps, f32
    max_tile = max(128, min(max_tile_cap,
                            (vreg_budget_bytes // bytes_per_col) // 128 * 128))
    tile = min(max_tile, max(128, rup(n, 128)))
    num = -(-n // tile)
    if num == 1 and n > 128:
        tile = max(128, rup(-(-n // 2), 128))
        num = -(-n // tile)
    if num % 2 == 1 and num > 1:
        tile2 = max(128, rup(-(-n // (num + 1)), 128))
        num2 = -(-n // tile2)
        if num2 % 2 == 0:
            tile, num = tile2, num2
        else:
            num += 1                              # pad one extra (cheap) tile
    return tile, num, tile * num


def forecaster_forward(x, params, horizon=1):
    """x: (batch, time, height, width) float32 — same convention as the PyTorch module."""
    assert horizon >= 1
    B, T, H, W = x.shape
    C = params["w_init"].shape[0]
    N = B * H * W
    f32 = jnp.float32

    # Host-side exact rewrites:
    #  * fold the 1x1 init conv into the encoder x-gate weights/bias,
    #  * fold the sigmoid 0.5 input scale into the i/f/o gate rows + readout.
    w_xg = (params["w_ex"] @ params["w_init"]).astype(f32)                      # (4C, 1)
    b_e = (params["w_ex"] @ params["b_init"] + params["b_e"]).astype(f32)       # (4C, 1)
    w_eh = params["w_eh"].astype(f32)
    w_dh = params["w_dh"].astype(f32)
    b_d = params["b_d"].astype(f32)

    gscale = jnp.concatenate([jnp.full((2 * C, 1), 0.5, f32),   # i, f rows
                              jnp.ones((C, 1), f32),            # g rows (tanh)
                              jnp.full((C, 1), 0.5, f32)], 0)   # o rows
    w_xg, w_eh, b_e = gscale * w_xg, gscale * w_eh, gscale * b_e
    w_dh, b_d = gscale * w_dh, gscale * b_d
    w_read = (0.5 * params["w_read"].T).astype(f32)              # (C, 1)
    b_read = (0.5 * params["b_read"]).astype(f32)                # (1, 1)

    tile_n, num_tiles, n_pad = _choose_tiling(N, C)

    # (batch,time,H,W) -> (time, B*H*W), pixels on the lane axis; pad lanes if needed.
    x_k = jnp.transpose(x, (1, 0, 2, 3)).reshape(T, N).astype(f32)
    if n_pad > N:
        x_k = jnp.pad(x_k, ((0, 0), (0, n_pad - N)))

    def full_spec(a):
        zeros = (0,) * a.ndim
        return pl.BlockSpec(a.shape, lambda p, _z=zeros: _z)

    kernel = functools.partial(_forecaster_kernel, T, horizon, False)

    out = pl.pallas_call(
        kernel,
        out_shape=jax.ShapeDtypeStruct((horizon, n_pad), f32),
        grid_spec=pltpu.PrefetchScalarGridSpec(
            num_scalar_prefetch=0,
            grid=(num_tiles,),
            in_specs=[
                pl.BlockSpec((T, tile_n), lambda p: (0, p)),
                full_spec(w_xg),
                full_spec(w_eh),
                full_spec(b_e),
                full_spec(w_dh),
                full_spec(b_d),
                full_spec(w_read),
                full_spec(b_read),
            ],
            out_specs=pl.BlockSpec((horizon, tile_n), lambda p: (0, p)),
        ),
        # Pixel tiles are independent -> megacore sharding on v7x; tile_n is
        # small enough that x/out blocks + weights stay far under the default
        # scoped VMEM limit on every generation (do not raise vmem_limit_bytes).
        compiler_params=pltpu.CompilerParams(dimension_semantics=("parallel",)),
    )(x_k, w_xg, w_eh, b_e, w_dh, b_d, w_read, b_read)

    out = out[:, :N].reshape(horizon, B, H, W)
    return jnp.transpose(out, (1, 0, 2, 3))


def forecaster_ref(x, params, horizon=1):
    """Pure-JAX reference with the original (un-folded) math for correctness."""
    B, T, H, W = x.shape
    C = params["w_init"].shape[0]
    N = B * H * W
    xk = jnp.transpose(x, (1, 0, 2, 3)).reshape(T, 1, N).astype(jnp.float32)
    h = jnp.zeros((C, N), jnp.float32)
    c = jnp.zeros((C, N), jnp.float32)

    def cell(gates, c):
        i = jax.nn.sigmoid(gates[:C]); f = jax.nn.sigmoid(gates[C:2 * C])
        g = jnp.tanh(gates[2 * C:3 * C]); o = jax.nn.sigmoid(gates[3 * C:])
        c2 = f * c + i * g
        return o * jnp.tanh(c2), c2

    for t in range(T):
        z = params["w_init"] @ xk[t] + params["b_init"]
        gates = params["w_ex"] @ z + params["w_eh"] @ h + params["b_e"]
        h, c = cell(gates, c)
    outs = []
    for _ in range(horizon):
        gates = params["w_dh"] @ h + params["b_d"]
        h, c = cell(gates, c)
        outs.append(jax.nn.sigmoid(params["w_read"] @ h + params["b_read"]))
    out = jnp.stack(outs, 0)
    return jnp.transpose(out.reshape(horizon, B, H, W), (1, 0, 2, 3))


def make_params(key, h_channels):
    C = h_channels
    ks = jax.random.split(key, 10)
    s = 0.1
    return {
        "w_init": s * jax.random.normal(ks[0], (C, 1), jnp.float32),       # Conv2d(1, C, 1)
        "b_init": s * jax.random.normal(ks[1], (C, 1), jnp.float32),
        "w_ex":   s * jax.random.normal(ks[2], (4 * C, C), jnp.float32),   # encoder ConvLSTM (x path)
        "w_eh":   s * jax.random.normal(ks[3], (4 * C, C), jnp.float32),   # encoder ConvLSTM (h path)
        "b_e":    s * jax.random.normal(ks[4], (4 * C, 1), jnp.float32),
        "w_dh":   s * jax.random.normal(ks[5], (4 * C, C), jnp.float32),   # decoder ConvLSTM (x_channels=0)
        "b_d":    s * jax.random.normal(ks[6], (4 * C, 1), jnp.float32),
        "w_read": s * jax.random.normal(ks[7], (1, C), jnp.float32),       # Conv2d(C, 1, 1)
        "b_read": s * jax.random.normal(ks[8], (1, 1), jnp.float32),
    }


if __name__ == "__main__":
    key = jax.random.PRNGKey(0)
    k_param, k_x = jax.random.split(key)

    h_channels = 8
    batch, context, height, width = 2, 6, 16, 16
    horizon = 3

    params = make_params(k_param, h_channels)
    x = jax.random.uniform(k_x, (batch, context, height, width), jnp.float32)

    out = forecaster_forward(x, params, horizon=horizon)
    out = jax.block_until_ready(out)

    ref = forecaster_ref(x, params, horizon=horizon)
    assert out.shape == (batch, horizon, height, width)
    assert jnp.allclose(out, ref, atol=1e-4, rtol=1e-4), "mismatch vs JAX reference"

    print("KERNEL_OK")
</pallas_src>

<mosaic_0001>
module attributes {stable_mosaic.version = 11 : i64} {
  func.func @_forecaster_kernel(%arg0: i32, %arg1: memref<6x256xf32, #tpu.memory_space<vmem>>, %arg2: memref<32x1xf32, #tpu.memory_space<vmem>>, %arg3: memref<32x8xf32, #tpu.memory_space<vmem>>, %arg4: memref<32x1xf32, #tpu.memory_space<vmem>>, %arg5: memref<32x8xf32, #tpu.memory_space<vmem>>, %arg6: memref<32x1xf32, #tpu.memory_space<vmem>>, %arg7: memref<8x1xf32, #tpu.memory_space<vmem>>, %arg8: memref<1x1xf32, #tpu.memory_space<vmem>>, %arg9: memref<3x256xf32, #tpu.memory_space<vmem>>) attributes {dimension_semantics = [#tpu.dimension_semantics<parallel>], iteration_bounds = array<i64: 2>, scalar_prefetch = 0 : i64, scratch_operands = 0 : i64, tpu.core_type = #tpu.core_type<tc>, window_params = [{transform_indices = @transform_0, window_bounds = array<i64: 6, 256>}, {pipeline_mode = #tpu.pipeline_mode<synchronous>, transform_indices = @transform_1, window_bounds = array<i64: 32, 1>}, {pipeline_mode = #tpu.pipeline_mode<synchronous>, transform_indices = @transform_2, window_bounds = array<i64: 32, 8>}, {pipeline_mode = #tpu.pipeline_mode<synchronous>, transform_indices = @transform_3, window_bounds = array<i64: 32, 1>}, {pipeline_mode = #tpu.pipeline_mode<synchronous>, transform_indices = @transform_4, window_bounds = array<i64: 32, 8>}, {pipeline_mode = #tpu.pipeline_mode<synchronous>, transform_indices = @transform_5, window_bounds = array<i64: 32, 1>}, {pipeline_mode = #tpu.pipeline_mode<synchronous>, transform_indices = @transform_6, window_bounds = array<i64: 8, 1>}, {pipeline_mode = #tpu.pipeline_mode<synchronous>, transform_indices = @transform_7, window_bounds = array<i64: 1, 1>}, {transform_indices = @transform_8, window_bounds = array<i64: 3, 256>}]} {
    %c0 = arith.constant 0 : index
    %c0_0 = arith.constant 0 : index
    %0 = vector.load %arg2[%c0, %c0_0] : memref<32x1xf32, #tpu.memory_space<vmem>>, vector<32x1xf32>
    %c0_1 = arith.constant 0 : index
    %c0_2 = arith.constant 0 : index
    %1 = vector.load %arg3[%c0_1, %c0_2] : memref<32x8xf32, #tpu.memory_space<vmem>>, vector<32x8xf32>
    %c0_3 = arith.constant 0 : index
    %c0_4 = arith.constant 0 : index
    %2 = vector.load %arg4[%c0_3, %c0_4] : memref<32x1xf32, #tpu.memory_space<vmem>>, vector<32x1xf32>
    %c0_5 = arith.constant 0 : index
    %c0_6 = arith.constant 0 : index
    %3 = vector.load %arg5[%c0_5, %c0_6] : memref<32x8xf32, #tpu.memory_space<vmem>>, vector<32x8xf32>
    %c0_7 = arith.constant 0 : index
    %c0_8 = arith.constant 0 : index
    %4 = vector.load %arg6[%c0_7, %c0_8] : memref<32x1xf32, #tpu.memory_space<vmem>>, vector<32x1xf32>
    %c0_9 = arith.constant 0 : index
    %c0_10 = arith.constant 0 : index
    %5 = vector.load %arg7[%c0_9, %c0_10] : memref<8x1xf32, #tpu.memory_space<vmem>>, vector<8x1xf32>
    %c0_11 = arith.constant 0 : index
    %c0_12 = arith.constant 0 : index
    %6 = vector.load %arg8[%c0_11, %c0_12] : memref<1x1xf32, #tpu.memory_space<vmem>>, vector<1x1xf32>
    %cst = arith.constant 0.000000e+00 : f32
    %7 = vector.broadcast %cst : f32 to vector<8x256xf32>
    %cst_13 = arith.constant 0.000000e+00 : f32
    %8 = vector.broadcast %cst_13 : f32 to vector<8x256xf32>
    %c0_i32 = arith.constant 0 : i32
    %9 = arith.index_cast %c0_i32 : i32 to index
    %c0_14 = arith.constant 0 : index
    %10 = vector.load %arg1[%9, %c0_14] : memref<6x256xf32, #tpu.memory_space<vmem>>, vector<1x256xf32>
    %11 = vector.broadcast %0 : vector<32x1xf32> to vector<32x256xf32>
    %12 = vector.broadcast %10 : vector<1x256xf32> to vector<32x256xf32>
    %13 = arith.mulf %11, %12 : vector<32x256xf32>
    %cst_15 = arith.constant dense<0.000000e+00> : vector<32x256xf32>
    %14 = tpu.matmul %1, %7, %cst_15 {dimension_numbers = #tpu.dot_dimension_numbers<[1], [0], [0], [1], [0, 0, 1, 1], [], []>} : vector<32x8xf32>, vector<8x256xf32>, vector<32x256xf32> -> vector<32x256xf32>
    %15 = arith.addf %13, %14 : vector<32x256xf32>
    %16 = vector.broadcast %2 : vector<32x1xf32> to vector<32x256xf32>
    %17 = arith.addf %15, %16 : vector<32x256xf32>
    %18 = vector.extract_strided_slice %17 {offsets = [0, 0], sizes = [8, 256], strides = [1, 1]} : vector<32x256xf32> to vector<8x256xf32>
    %19 = math.tanh %18 : vector<8x256xf32>
    %cst_16 = arith.constant 5.000000e-01 : f32
    %20 = vector.broadcast %cst_16 : f32 to vector<8x256xf32>
    %21 = arith.mulf %20, %19 : vector<8x256xf32>
    %cst_17 = arith.constant 5.000000e-01 : f32
    %22 = vector.broadcast %cst_17 : f32 to vector<8x256xf32>
    %23 = arith.addf %21, %22 : vector<8x256xf32>
    %24 = vector.extract_strided_slice %17 {offsets = [8, 0], sizes = [8, 256], strides = [1, 1]} : vector<32x256xf32> to vector<8x256xf32>
    %25 = math.tanh %24 : vector<8x256xf32>
    %cst_18 = arith.constant 5.000000e-01 : f32
    %26 = vector.broadcast %cst_18 : f32 to vector<8x256xf32>
    %27 = arith.mulf %26, %25 : vector<8x256xf32>
    %cst_19 = arith.constant 5.000000e-01 : f32
    %28 = vector.broadcast %cst_19 : f32 to vector<8x256xf32>
    %29 = arith.addf %27, %28 : vector<8x256xf32>
    %30 = vector.extract_strided_slice %17 {offsets = [16, 0], sizes = [8, 256], strides = [1, 1]} : vector<32x256xf32> to vector<8x256xf32>
    %31 = math.tanh %30 : vector<8x256xf32>
    %32 = vector.extract_strided_slice %17 {offsets = [24, 0], sizes = [8, 256], strides = [1, 1]} : vector<32x256xf32> to vector<8x256xf32>
    %33 = math.tanh %32 : vector<8x256xf32>
    %cst_20 = arith.constant 5.000000e-01 : f32
    %34 = vector.broadcast %cst_20 : f32 to vector<8x256xf32>
    %35 = arith.mulf %34, %33 : vector<8x256xf32>
    %cst_21 = arith.constant 5.000000e-01 : f32
    %36 = vector.broadcast %cst_21 : f32 to vector<8x256xf32>
    %37 = arith.addf %35, %36 : vector<8x256xf32>
    %38 = arith.mulf %29, %8 : vector<8x256xf32>
    %39 = arith.mulf %23, %31 : vector<8x256xf32>
    %40 = arith.addf %38, %39 : vector<8x256xf32>
    %41 = math.tanh %40 : vector<8x256xf32>
    %42 = arith.mulf %37, %41 : vector<8x256xf32>
    %c1_i32 = arith.constant 1 : i32
    %43 = arith.index_cast %c1_i32 : i32 to index
    %c0_22 = arith.constant 0 : index
    %44 = vector.load %arg1[%43, %c0_22] : memref<6x256xf32, #tpu.memory_space<vmem>>, vector<1x256xf32>
    %45 = vector.broadcast %0 : vector<32x1xf32> to vector<32x256xf32>
    %46 = vector.broadcast %44 : vector<1x256xf32> to vector<32x256xf32>
    %47 = arith.mulf %45, %46 : vector<32x256xf32>
    %cst_23 = arith.constant dense<0.000000e+00> : vector<32x256xf32>
    %48 = tpu.matmul %1, %42, %cst_23 {dimension_numbers = #tpu.dot_dimension_numbers<[1], [0], [0], [1], [0, 0, 1, 1], [], []>} : vector<32x8xf32>, vector<8x256xf32>, vector<32x256xf32> -> vector<32x256xf32>
    %49 = arith.addf %47, %48 : vector<32x256xf32>
    %50 = vector.broadcast %2 : vector<32x1xf32> to vector<32x256xf32>
    %51 = arith.addf %49, %50 : vector<32x256xf32>
    %52 = vector.extract_strided_slice %51 {offsets = [0, 0], sizes = [8, 256], strides = [1, 1]} : vector<32x256xf32> to vector<8x256xf32>
    %53 = math.tanh %52 : vector<8x256xf32>
    %cst_24 = arith.constant 5.000000e-01 : f32
    %54 = vector.broadcast %cst_24 : f32 to vector<8x256xf32>
    %55 = arith.mulf %54, %53 : vector<8x256xf32>
    %cst_25 = arith.constant 5.000000e-01 : f32
    %56 = vector.broadcast %cst_25 : f32 to vector<8x256xf32>
    %57 = arith.addf %55, %56 : vector<8x256xf32>
    %58 = vector.extract_strided_slice %51 {offsets = [8, 0], sizes = [8, 256], strides = [1, 1]} : vector<32x256xf32> to vector<8x256xf32>
    %59 = math.tanh %58 : vector<8x256xf32>
    %cst_26 = arith.constant 5.000000e-01 : f32
    %60 = vector.broadcast %cst_26 : f32 to vector<8x256xf32>
    %61 = arith.mulf %60, %59 : vector<8x256xf32>
    %cst_27 = arith.constant 5.000000e-01 : f32
    %62 = vector.broadcast %cst_27 : f32 to vector<8x256xf32>
    %63 = arith.addf %61, %62 : vector<8x256xf32>
    %64 = vector.extract_strided_slice %51 {offsets = [16, 0], sizes = [8, 256], strides = [1, 1]} : vector<32x256xf32> to vector<8x256xf32>
    %65 = math.tanh %64 : vector<8x256xf32>
    %66 = vector.extract_strided_slice %51 {offsets = [24, 0], sizes = [8, 256], strides = [1, 1]} : vector<32x256xf32> to vector<8x256xf32>
    %67 = math.tanh %66 : vector<8x256xf32>
    %cst_28 = arith.constant 5.000000e-01 : f32
    %68 = vector.broadcast %cst_28 : f32 to vector<8x256xf32>
    %69 = arith.mulf %68, %67 : vector<8x256xf32>
    %cst_29 = arith.constant 5.000000e-01 : f32
    %70 = vector.broadcast %cst_29 : f32 to vector<8x256xf32>
    %71 = arith.addf %69, %70 : vector<8x256xf32>
    %72 = arith.mulf %63, %40 : vector<8x256xf32>
    %73 = arith.mulf %57, %65 : vector<8x256xf32>
    %74 = arith.addf %72, %73 : vector<8x256xf32>
    %75 = math.tanh %74 : vector<8x256xf32>
    %76 = arith.mulf %71, %75 : vector<8x256xf32>
    %c2_i32 = arith.constant 2 : i32
    %77 = arith.index_cast %c2_i32 : i32 to index
    %c0_30 = arith.constant 0 : index
    %78 = vector.load %arg1[%77, %c0_30] : memref<6x256xf32, #tpu.memory_space<vmem>>, vector<1x256xf32>
    %79 = vector.broadcast %0 : vector<32x1xf32> to vector<32x256xf32>
    %80 = vector.broadcast %78 : vector<1x256xf32> to vector<32x256xf32>
    %81 = arith.mulf %79, %80 : vector<32x256xf32>
    %cst_31 = arith.constant dense<0.000000e+00> : vector<32x256xf32>
    %82 = tpu.matmul %1, %76, %cst_31 {dimension_numbers = #tpu.dot_dimension_numbers<[1], [0], [0], [1], [0, 0, 1, 1], [], []>} : vector<32x8xf32>, vector<8x256xf32>, vector<32x256xf32> -> vector<32x256xf32>
    %83 = arith.addf %81, %82 : vector<32x256xf32>
    %84 = vector.broadcast %2 : vector<32x1xf32> to vector<32x256xf32>
    %85 = arith.addf %83, %84 : vector<32x256xf32>
    %86 = vector.extract_strided_slice %85 {offsets = [0, 0], sizes = [8, 256], strides = [1, 1]} : vector<32x256xf32> to vector<8x256xf32>
    %87 = math.tanh %86 : vector<8x256xf32>
    %cst_32 = arith.constant 5.000000e-01 : f32
    %88 = vector.broadcast %cst_32 : f32 to vector<8x256xf32>
    %89 = arith.mulf %88, %87 : vector<8x256xf32>
    %cst_33 = arith.constant 5.000000e-01 : f32
    %90 = vector.broadcast %cst_33 : f32 to vector<8x256xf32>
    %91 = arith.addf %89, %90 : vector<8x256xf32>
    %92 = vector.extract_strided_slice %85 {offsets = [8, 0], sizes = [8, 256], strides = [1, 1]} : vector<32x256xf32> to vector<8x256xf32>
    %93 = math.tanh %92 : vector<8x256xf32>
    %cst_34 = arith.constant 5.000000e-01 : f32
    %94 = vector.broadcast %cst_34 : f32 to vector<8x256xf32>
    %95 = arith.mulf %94, %93 : vector<8x256xf32>
    %cst_35 = arith.constant 5.000000e-01 : f32
    %96 = vector.broadcast %cst_35 : f32 to vector<8x256xf32>
    %97 = arith.addf %95, %96 : vector<8x256xf32>
    %98 = vector.extract_strided_slice %85 {offsets = [16, 0], sizes = [8, 256], strides = [1, 1]} : vector<32x256xf32> to vector<8x256xf32>
    %99 = math.tanh %98 : vector<8x256xf32>
    %100 = vector.extract_strided_slice %85 {offsets = [24, 0], sizes = [8, 256], strides = [1, 1]} : vector<32x256xf32> to vector<8x256xf32>
    %101 = math.tanh %100 : vector<8x256xf32>
    %cst_36 = arith.constant 5.000000e-01 : f32
    %102 = vector.broadcast %cst_36 : f32 to vector<8x256xf32>
    %103 = arith.mulf %102, %101 : vector<8x256xf32>
    %cst_37 = arith.constant 5.000000e-01 : f32
    %104 = vector.broadcast %cst_37 : f32 to vector<8x256xf32>
    %105 = arith.addf %103, %104 : vector<8x256xf32>
    %106 = arith.mulf %97, %74 : vector<8x256xf32>
    %107 = arith.mulf %91, %99 : vector<8x256xf32>
    %108 = arith.addf %106, %107 : vector<8x256xf32>
    %109 = math.tanh %108 : vector<8x256xf32>
    %110 = arith.mulf %105, %109 : vector<8x256xf32>
    %c3_i32 = arith.constant 3 : i32
    %111 = arith.index_cast %c3_i32 : i32 to index
    %c0_38 = arith.constant 0 : index
    %112 = vector.load %arg1[%111, %c0_38] : memref<6x256xf32, #tpu.memory_space<vmem>>, vector<1x256xf32>
    %113 = vector.broadcast %0 : vector<32x1xf32> to vector<32x256xf32>
    %114 = vector.broadcast %112 : vector<1x256xf32> to vector<32x256xf32>
    %115 = arith.mulf %113, %114 : vector<32x256xf32>
    %cst_39 = arith.constant dense<0.000000e+00> : vector<32x256xf32>
    %116 = tpu.matmul %1, %110, %cst_39 {dimension_numbers = #tpu.dot_dimension_numbers<[1], [0], [0], [1], [0, 0, 1, 1], [], []>} : vector<32x8xf32>, vector<8x256xf32>, vector<32x256xf32> -> vector<32x256xf32>
    %117 = arith.addf %115, %116 : vector<32x256xf32>
    %118 = vector.broadcast %2 : vector<32x1xf32> to vector<32x256xf32>
    %119 = arith.addf %117, %118 : vector<32x256xf32>
    %120 = vector.extract_strided_slice %119 {offsets = [0, 0], sizes = [8, 256], strides = [1, 1]} : vector<32x256xf32> to vector<8x256xf32>
    %121 = math.tanh %120 : vector<8x256xf32>
    %cst_40 = arith.constant 5.000000e-01 : f32
    %122 = vector.broadcast %cst_40 : f32 to vector<8x256xf32>
    %123 = arith.mulf %122, %121 : vector<8x256xf32>
    %cst_41 = arith.constant 5.000000e-01 : f32
    %124 = vector.broadcast %cst_41 : f32 to vector<8x256xf32>
    %125 = arith.addf %123, %124 : vector<8x256xf32>
    %126 = vector.extract_strided_slice %119 {offsets = [8, 0], sizes = [8, 256], strides = [1, 1]} : vector<32x256xf32> to vector<8x256xf32>
    %127 = math.tanh %126 : vector<8x256xf32>
    %cst_42 = arith.constant 5.000000e-01 : f32
    %128 = vector.broadcast %cst_42 : f32 to vector<8x256xf32>
    %129 = arith.mulf %128, %127 : vector<8x256xf32>
    %cst_43 = arith.constant 5.000000e-01 : f32
    %130 = vector.broadcast %cst_43 : f32 to vector<8x256xf32>
    %131 = arith.addf %129, %130 : vector<8x256xf32>
    %132 = vector.extract_strided_slice %119 {offsets = [16, 0], sizes = [8, 256], strides = [1, 1]} : vector<32x256xf32> to vector<8x256xf32>
    %133 = math.tanh %132 : vector<8x256xf32>
    %134 = vector.extract_strided_slice %119 {offsets = [24, 0], sizes = [8, 256], strides = [1, 1]} : vector<32x256xf32> to vector<8x256xf32>
    %135 = math.tanh %134 : vector<8x256xf32>
    %cst_44 = arith.constant 5.000000e-01 : f32
    %136 = vector.broadcast %cst_44 : f32 to vector<8x256xf32>
    %137 = arith.mulf %136, %135 : vector<8x256xf32>
    %cst_45 = arith.constant 5.000000e-01 : f32
    %138 = vector.broadcast %cst_45 : f32 to vector<8x256xf32>
    %139 = arith.addf %137, %138 : vector<8x256xf32>
    %140 = arith.mulf %131, %108 : vector<8x256xf32>
    %141 = arith.mulf %125, %133 : vector<8x256xf32>
    %142 = arith.addf %140, %141 : vector<8x256xf32>
    %143 = math.tanh %142 : vector<8x256xf32>
    %144 = arith.mulf %139, %143 : vector<8x256xf32>
    %c4_i32 = arith.constant 4 : i32
    %145 = arith.index_cast %c4_i32 : i32 to index
    %c0_46 = arith.constant 0 : index
    %146 = vector.load %arg1[%145, %c0_46] : memref<6x256xf32, #tpu.memory_space<vmem>>, vector<1x256xf32>
    %147 = vector.broadcast %0 : vector<32x1xf32> to vector<32x256xf32>
    %148 = vector.broadcast %146 : vector<1x256xf32> to vector<32x256xf32>
    %149 = arith.mulf %147, %148 : vector<32x256xf32>
    %cst_47 = arith.constant dense<0.000000e+00> : vector<32x256xf32>
    %150 = tpu.matmul %1, %144, %cst_47 {dimension_numbers = #tpu.dot_dimension_numbers<[1], [0], [0], [1], [0, 0, 1, 1], [], []>} : vector<32x8xf32>, vector<8x256xf32>, vector<32x256xf32> -> vector<32x256xf32>
    %151 = arith.addf %149, %150 : vector<32x256xf32>
    %152 = vector.broadcast %2 : vector<32x1xf32> to vector<32x256xf32>
    %153 = arith.addf %151, %152 : vector<32x256xf32>
    %154 = vector.extract_strided_slice %153 {offsets = [0, 0], sizes = [8, 256], strides = [1, 1]} : vector<32x256xf32> to vector<8x256xf32>
    %155 = math.tanh %154 : vector<8x256xf32>
    %cst_48 = arith.constant 5.000000e-01 : f32
    %156 = vector.broadcast %cst_48 : f32 to vector<8x256xf32>
    %157 = arith.mulf %156, %155 : vector<8x256xf32>
    %cst_49 = arith.constant 5.000000e-01 : f32
    %158 = vector.broadcast %cst_49 : f32 to vector<8x256xf32>
    %159 = arith.addf %157, %158 : vector<8x256xf32>
    %160 = vector.extract_strided_slice %153 {offsets = [8, 0], sizes = [8, 256], strides = [1, 1]} : vector<32x256xf32> to vector<8x256xf32>
    %161 = math.tanh %160 : vector<8x256xf32>
    %cst_50 = arith.constant 5.000000e-01 : f32
    %162 = vector.broadcast %cst_50 : f32 to vector<8x256xf32>
    %163 = arith.mulf %162, %161 : vector<8x256xf32>
    %cst_51 = arith.constant 5.000000e-01 : f32
    %164 = vector.broadcast %cst_51 : f32 to vector<8x256xf32>
    %165 = arith.addf %163, %164 : vector<8x256xf32>
    %166 = vector.extract_strided_slice %153 {offsets = [16, 0], sizes = [8, 256], strides = [1, 1]} : vector<32x256xf32> to vector<8x256xf32>
    %167 = math.tanh %166 : vector<8x256xf32>
    %168 = vector.extract_strided_slice %153 {offsets = [24, 0], sizes = [8, 256], strides = [1, 1]} : vector<32x256xf32> to vector<8x256xf32>
    %169 = math.tanh %168 : vector<8x256xf32>
    %cst_52 = arith.constant 5.000000e-01 : f32
    %170 = vector.broadcast %cst_52 : f32 to vector<8x256xf32>
    %171 = arith.mulf %170, %169 : vector<8x256xf32>
    %cst_53 = arith.constant 5.000000e-01 : f32
    %172 = vector.broadcast %cst_53 : f32 to vector<8x256xf32>
    %173 = arith.addf %171, %172 : vector<8x256xf32>
    %174 = arith.mulf %165, %142 : vector<8x256xf32>
    %175 = arith.mulf %159, %167 : vector<8x256xf32>
    %176 = arith.addf %174, %175 : vector<8x256xf32>
    %177 = math.tanh %176 : vector<8x256xf32>
    %178 = arith.mulf %173, %177 : vector<8x256xf32>
    %c5_i32 = arith.constant 5 : i32
    %179 = arith.index_cast %c5_i32 : i32 to index
    %c0_54 = arith.constant 0 : index
    %180 = vector.load %arg1[%179, %c0_54] : memref<6x256xf32, #tpu.memory_space<vmem>>, vector<1x256xf32>
    %181 = vector.broadcast %0 : vector<32x1xf32> to vector<32x256xf32>
    %182 = vector.broadcast %180 : vector<1x256xf32> to vector<32x256xf32>
    %183 = arith.mulf %181, %182 : vector<32x256xf32>
    %cst_55 = arith.constant dense<0.000000e+00> : vector<32x256xf32>
    %184 = tpu.matmul %1, %178, %cst_55 {dimension_numbers = #tpu.dot_dimension_numbers<[1], [0], [0], [1], [0, 0, 1, 1], [], []>} : vector<32x8xf32>, vector<8x256xf32>, vector<32x256xf32> -> vector<32x256xf32>
    %185 = arith.addf %183, %184 : vector<32x256xf32>
    %186 = vector.broadcast %2 : vector<32x1xf32> to vector<32x256xf32>
    %187 = arith.addf %185, %186 : vector<32x256xf32>
    %188 = vector.extract_strided_slice %187 {offsets = [0, 0], sizes = [8, 256], strides = [1, 1]} : vector<32x256xf32> to vector<8x256xf32>
    %189 = math.tanh %188 : vector<8x256xf32>
    %cst_56 = arith.constant 5.000000e-01 : f32
    %190 = vector.broadcast %cst_56 : f32 to vector<8x256xf32>
    %191 = arith.mulf %190, %189 : vector<8x256xf32>
    %cst_57 = arith.constant 5.000000e-01 : f32
    %192 = vector.broadcast %cst_57 : f32 to vector<8x256xf32>
    %193 = arith.addf %191, %192 : vector<8x256xf32>
    %194 = vector.extract_strided_slice %187 {offsets = [8, 0], sizes = [8, 256], strides = [1, 1]} : vector<32x256xf32> to vector<8x256xf32>
    %195 = math.tanh %194 : vector<8x256xf32>
    %cst_58 = arith.constant 5.000000e-01 : f32
    %196 = vector.broadcast %cst_58 : f32 to vector<8x256xf32>
    %197 = arith.mulf %196, %195 : vector<8x256xf32>
    %cst_59 = arith.constant 5.000000e-01 : f32
    %198 = vector.broadcast %cst_59 : f32 to vector<8x256xf32>
    %199 = arith.addf %197, %198 : vector<8x256xf32>
    %200 = vector.extract_strided_slice %187 {offsets = [16, 0], sizes = [8, 256], strides = [1, 1]} : vector<32x256xf32> to vector<8x256xf32>
    %201 = math.tanh %200 : vector<8x256xf32>
    %202 = vector.extract_strided_slice %187 {offsets = [24, 0], sizes = [8, 256], strides = [1, 1]} : vector<32x256xf32> to vector<8x256xf32>
    %203 = math.tanh %202 : vector<8x256xf32>
    %cst_60 = arith.constant 5.000000e-01 : f32
    %204 = vector.broadcast %cst_60 : f32 to vector<8x256xf32>
    %205 = arith.mulf %204, %203 : vector<8x256xf32>
    %cst_61 = arith.constant 5.000000e-01 : f32
    %206 = vector.broadcast %cst_61 : f32 to vector<8x256xf32>
    %207 = arith.addf %205, %206 : vector<8x256xf32>
    %208 = arith.mulf %199, %176 : vector<8x256xf32>
    %209 = arith.mulf %193, %201 : vector<8x256xf32>
    %210 = arith.addf %208, %209 : vector<8x256xf32>
    %211 = math.tanh %210 : vector<8x256xf32>
    %212 = arith.mulf %207, %211 : vector<8x256xf32>
    %c6_i32 = arith.constant 6 : i32
    %cst_62 = arith.constant dense<0.000000e+00> : vector<32x256xf32>
    %213 = tpu.matmul %3, %212, %cst_62 {dimension_numbers = #tpu.dot_dimension_numbers<[1], [0], [0], [1], [0, 0, 1, 1], [], []>} : vector<32x8xf32>, vector<8x256xf32>, vector<32x256xf32> -> vector<32x256xf32>
    %214 = vector.broadcast %4 : vector<32x1xf32> to vector<32x256xf32>
    %215 = arith.addf %213, %214 : vector<32x256xf32>
    %216 = vector.extract_strided_slice %215 {offsets = [0, 0], sizes = [8, 256], strides = [1, 1]} : vector<32x256xf32> to vector<8x256xf32>
    %217 = math.tanh %216 : vector<8x256xf32>
    %cst_63 = arith.constant 5.000000e-01 : f32
    %218 = vector.broadcast %cst_63 : f32 to vector<8x256xf32>
    %219 = arith.mulf %218, %217 : vector<8x256xf32>
    %cst_64 = arith.constant 5.000000e-01 : f32
    %220 = vector.broadcast %cst_64 : f32 to vector<8x256xf32>
    %221 = arith.addf %219, %220 : vector<8x256xf32>
    %222 = vector.extract_strided_slice %215 {offsets = [8, 0], sizes = [8, 256], strides = [1, 1]} : vector<32x256xf32> to vector<8x256xf32>
    %223 = math.tanh %222 : vector<8x256xf32>
    %cst_65 = arith.constant 5.000000e-01 : f32
    %224 = vector.broadcast %cst_65 : f32 to vector<8x256xf32>
    %225 = arith.mulf %224, %223 : vector<8x256xf32>
    %cst_66 = arith.constant 5.000000e-01 : f32
    %226 = vector.broadcast %cst_66 : f32 to vector<8x256xf32>
    %227 = arith.addf %225, %226 : vector<8x256xf32>
    %228 = vector.extract_strided_slice %215 {offsets = [16, 0], sizes = [8, 256], strides = [1, 1]} : vector<32x256xf32> to vector<8x256xf32>
    %229 = math.tanh %228 : vector<8x256xf32>
    %230 = vector.extract_strided_slice %215 {offsets = [24, 0], sizes = [8, 256], strides = [1, 1]} : vector<32x256xf32> to vector<8x256xf32>
    %231 = math.tanh %230 : vector<8x256xf32>
    %cst_67 = arith.constant 5.000000e-01 : f32
    %232 = vector.broadcast %cst_67 : f32 to vector<8x256xf32>
    %233 = arith.mulf %232, %231 : vector<8x256xf32>
    %cst_68 = arith.constant 5.000000e-01 : f32
    %234 = vector.broadcast %cst_68 : f32 to vector<8x256xf32>
    %235 = arith.addf %233, %234 : vector<8x256xf32>
    %236 = arith.mulf %227, %210 : vector<8x256xf32>
    %237 = arith.mulf %221, %229 : vector<8x256xf32>
    %238 = arith.addf %236, %237 : vector<8x256xf32>
    %239 = math.tanh %238 : vector<8x256xf32>
    %240 = arith.mulf %235, %239 : vector<8x256xf32>
    %241 = vector.broadcast %5 : vector<8x1xf32> to vector<8x256xf32>
    %242 = arith.mulf %241, %240 : vector<8x256xf32>
    %cst_69 = arith.constant dense<0.000000e+00> : vector<256xf32>
    %243 = vector.multi_reduction <add>, %242, %cst_69 [0] : vector<8x256xf32> to vector<256xf32>
    %244 = vector.shape_cast %243 : vector<256xf32> to vector<1x256xf32>
    %245 = vector.broadcast %6 : vector<1x1xf32> to vector<1x256xf32>
    %246 = arith.addf %244, %245 : vector<1x256xf32>
    %247 = math.tanh %246 : vector<1x256xf32>
    %cst_70 = arith.constant 5.000000e-01 : f32
    %248 = vector.broadcast %cst_70 : f32 to vector<1x256xf32>
    %249 = arith.mulf %248, %247 : vector<1x256xf32>
    %cst_71 = arith.constant 5.000000e-01 : f32
    %250 = vector.broadcast %cst_71 : f32 to vector<1x256xf32>
    %251 = arith.addf %249, %250 : vector<1x256xf32>
    %cst_72 = arith.constant dense<0.000000e+00> : vector<32x256xf32>
    %252 = tpu.matmul %3, %240, %cst_72 {dimension_numbers = #tpu.dot_dimension_numbers<[1], [0], [0], [1], [0, 0, 1, 1], [], []>} : vector<32x8xf32>, vector<8x256xf32>, vector<32x256xf32> -> vector<32x256xf32>
    %253 = vector.broadcast %4 : vector<32x1xf32> to vector<32x256xf32>
    %254 = arith.addf %252, %253 : vector<32x256xf32>
    %255 = vector.extract_strided_slice %254 {offsets = [0, 0], sizes = [8, 256], strides = [1, 1]} : vector<32x256xf32> to vector<8x256xf32>
    %256 = math.tanh %255 : vector<8x256xf32>
    %cst_73 = arith.constant 5.000000e-01 : f32
    %257 = vector.broadcast %cst_73 : f32 to vector<8x256xf32>
    %258 = arith.mulf %257, %256 : vector<8x256xf32>
    %cst_74 = arith.constant 5.000000e-01 : f32
    %259 = vector.broadcast %cst_74 : f32 to vector<8x256xf32>
    %260 = arith.addf %258, %259 : vector<8x256xf32>
    %261 = vector.extract_strided_slice %254 {offsets = [8, 0], sizes = [8, 256], strides = [1, 1]} : vector<32x256xf32> to vector<8x256xf32>
    %262 = math.tanh %261 : vector<8x256xf32>
    %cst_75 = arith.constant 5.000000e-01 : f32
    %263 = vector.broadcast %cst_75 : f32 to vector<8x256xf32>
    %264 = arith.mulf %263, %262 : vector<8x256xf32>
    %cst_76 = arith.constant 5.000000e-01 : f32
    %265 = vector.broadcast %cst_76 : f32 to vector<8x256xf32>
    %266 = arith.addf %264, %265 : vector<8x256xf32>
    %267 = vector.extract_strided_slice %254 {offsets = [16, 0], sizes = [8, 256], strides = [1, 1]} : vector<32x256xf32> to vector<8x256xf32>
    %268 = math.tanh %267 : vector<8x256xf32>
    %269 = vector.extract_strided_slice %254 {offsets = [24, 0], sizes = [8, 256], strides = [1, 1]} : vector<32x256xf32> to vector<8x256xf32>
    %270 = math.tanh %269 : vector<8x256xf32>
    %cst_77 = arith.constant 5.000000e-01 : f32
    %271 = vector.broadcast %cst_77 : f32 to vector<8x256xf32>
    %272 = arith.mulf %271, %270 : vector<8x256xf32>
    %cst_78 = arith.constant 5.000000e-01 : f32
    %273 = vector.broadcast %cst_78 : f32 to vector<8x256xf32>
    %274 = arith.addf %272, %273 : vector<8x256xf32>
    %275 = arith.mulf %266, %238 : vector<8x256xf32>
    %276 = arith.mulf %260, %268 : vector<8x256xf32>
    %277 = arith.addf %275, %276 : vector<8x256xf32>
    %278 = math.tanh %277 : vector<8x256xf32>
    %279 = arith.mulf %274, %278 : vector<8x256xf32>
    %280 = vector.broadcast %5 : vector<8x1xf32> to vector<8x256xf32>
    %281 = arith.mulf %280, %279 : vector<8x256xf32>
    %cst_79 = arith.constant dense<0.000000e+00> : vector<256xf32>
    %282 = vector.multi_reduction <add>, %281, %cst_79 [0] : vector<8x256xf32> to vector<256xf32>
    %283 = vector.shape_cast %282 : vector<256xf32> to vector<1x256xf32>
    %284 = vector.broadcast %6 : vector<1x1xf32> to vector<1x256xf32>
    %285 = arith.addf %283, %284 : vector<1x256xf32>
    %286 = math.tanh %285 : vector<1x256xf32>
    %cst_80 = arith.constant 5.000000e-01 : f32
    %287 = vector.broadcast %cst_80 : f32 to vector<1x256xf32>
    %288 = arith.mulf %287, %286 : vector<1x256xf32>
    %cst_81 = arith.constant 5.000000e-01 : f32
    %289 = vector.broadcast %cst_81 : f32 to vector<1x256xf32>
    %290 = arith.addf %288, %289 : vector<1x256xf32>
    %cst_82 = arith.constant dense<0.000000e+00> : vector<32x256xf32>
    %291 = tpu.matmul %3, %279, %cst_82 {dimension_numbers = #tpu.dot_dimension_numbers<[1], [0], [0], [1], [0, 0, 1, 1], [], []>} : vector<32x8xf32>, vector<8x256xf32>, vector<32x256xf32> -> vector<32x256xf32>
    %292 = vector.broadcast %4 : vector<32x1xf32> to vector<32x256xf32>
    %293 = arith.addf %291, %292 : vector<32x256xf32>
    %294 = vector.extract_strided_slice %293 {offsets = [0, 0], sizes = [8, 256], strides = [1, 1]} : vector<32x256xf32> to vector<8x256xf32>
    %295 = math.tanh %294 : vector<8x256xf32>
    %cst_83 = arith.constant 5.000000e-01 : f32
    %296 = vector.broadcast %cst_83 : f32 to vector<8x256xf32>
    %297 = arith.mulf %296, %295 : vector<8x256xf32>
    %cst_84 = arith.constant 5.000000e-01 : f32
    %298 = vector.broadcast %cst_84 : f32 to vector<8x256xf32>
    %299 = arith.addf %297, %298 : vector<8x256xf32>
    %300 = vector.extract_strided_slice %293 {offsets = [8, 0], sizes = [8, 256], strides = [1, 1]} : vector<32x256xf32> to vector<8x256xf32>
    %301 = math.tanh %300 : vector<8x256xf32>
    %cst_85 = arith.constant 5.000000e-01 : f32
    %302 = vector.broadcast %cst_85 : f32 to vector<8x256xf32>
    %303 = arith.mulf %302, %301 : vector<8x256xf32>
    %cst_86 = arith.constant 5.000000e-01 : f32
    %304 = vector.broadcast %cst_86 : f32 to vector<8x256xf32>
    %305 = arith.addf %303, %304 : vector<8x256xf32>
    %306 = vector.extract_strided_slice %293 {offsets = [16, 0], sizes = [8, 256], strides = [1, 1]} : vector<32x256xf32> to vector<8x256xf32>
    %307 = math.tanh %306 : vector<8x256xf32>
    %308 = vector.extract_strided_slice %293 {offsets = [24, 0], sizes = [8, 256], strides = [1, 1]} : vector<32x256xf32> to vector<8x256xf32>
    %309 = math.tanh %308 : vector<8x256xf32>
    %cst_87 = arith.constant 5.000000e-01 : f32
    %310 = vector.broadcast %cst_87 : f32 to vector<8x256xf32>
    %311 = arith.mulf %310, %309 : vector<8x256xf32>
    %cst_88 = arith.constant 5.000000e-01 : f32
    %312 = vector.broadcast %cst_88 : f32 to vector<8x256xf32>
    %313 = arith.addf %311, %312 : vector<8x256xf32>
    %314 = arith.mulf %305, %277 : vector<8x256xf32>
    %315 = arith.mulf %299, %307 : vector<8x256xf32>
    %316 = arith.addf %314, %315 : vector<8x256xf32>
    %317 = math.tanh %316 : vector<8x256xf32>
    %318 = arith.mulf %313, %317 : vector<8x256xf32>
    %319 = vector.broadcast %5 : vector<8x1xf32> to vector<8x256xf32>
    %320 = arith.mulf %319, %318 : vector<8x256xf32>
    %cst_89 = arith.constant dense<0.000000e+00> : vector<256xf32>
    %321 = vector.multi_reduction <add>, %320, %cst_89 [0] : vector<8x256xf32> to vector<256xf32>
    %322 = vector.shape_cast %321 : vector<256xf32> to vector<1x256xf32>
    %323 = vector.broadcast %6 : vector<1x1xf32> to vector<1x256xf32>
    %324 = arith.addf %322, %323 : vector<1x256xf32>
    %325 = math.tanh %324 : vector<1x256xf32>
    %cst_90 = arith.constant 5.000000e-01 : f32
    %326 = vector.broadcast %cst_90 : f32 to vector<1x256xf32>
    %327 = arith.mulf %326, %325 : vector<1x256xf32>
    %cst_91 = arith.constant 5.000000e-01 : f32
    %328 = vector.broadcast %cst_91 : f32 to vector<1x256xf32>
    %329 = arith.addf %327, %328 : vector<1x256xf32>
    %330 = tpu.concatenate %251, %290, %329 in 0 : vector<1x256xf32>, vector<1x256xf32>, vector<1x256xf32> -> vector<3x256xf32>
    %c0_92 = arith.constant 0 : index
    %c0_93 = arith.constant 0 : index
    %331 = vector.load %arg9[%c0_92, %c0_93] : memref<3x256xf32, #tpu.memory_space<vmem>>, vector<3x256xf32>
    tpu.vector_store %arg9[%c0_92, %c0_93], %330 {strides = array<i32>} : memref<3x256xf32, #tpu.memory_space<vmem>>, vector<3x256xf32>,
    return
  }
  func.func @transform_0(%arg0: i32) -> (i32, i32) {
    %c0_i32 = arith.constant 0 : i32
    %c0_i32_0 = arith.constant 0 : i32
    return %c0_i32, %arg0 : i32, i32
  }
  func.func @transform_1(%arg0: i32) -> (i32, i32) {
    %c0_i32 = arith.constant 0 : i32
    %c0_i32_0 = arith.constant 0 : i32
    %c0_i32_1 = arith.constant 0 : i32
    return %c0_i32, %c0_i32_0 : i32, i32
  }
  func.func @transform_2(%arg0: i32) -> (i32, i32) {
    %c0_i32 = arith.constant 0 : i32
    %c0_i32_0 = arith.constant 0 : i32
    %c0_i32_1 = arith.constant 0 : i32
    return %c0_i32, %c0_i32_0 : i32, i32
  }
  func.func @transform_3(%arg0: i32) -> (i32, i32) {
    %c0_i32 = arith.constant 0 : i32
    %c0_i32_0 = arith.constant 0 : i32
    %c0_i32_1 = arith.constant 0 : i32
    return %c0_i32, %c0_i32_0 : i32, i32
  }
  func.func @transform_4(%arg0: i32) -> (i32, i32) {
    %c0_i32 = arith.constant 0 : i32
    %c0_i32_0 = arith.constant 0 : i32
    %c0_i32_1 = arith.constant 0 : i32
    return %c0_i32, %c0_i32_0 : i32, i32
  }
  func.func @transform_5(%arg0: i32) -> (i32, i32) {
    %c0_i32 = arith.constant 0 : i32
    %c0_i32_0 = arith.constant 0 : i32
    %c0_i32_1 = arith.constant 0 : i32
    return %c0_i32, %c0_i32_0 : i32, i32
  }
  func.func @transform_6(%arg0: i32) -> (i32, i32) {
    %c0_i32 = arith.constant 0 : i32
    %c0_i32_0 = arith.constant 0 : i32
    %c0_i32_1 = arith.constant 0 : i32
    return %c0_i32, %c0_i32_0 : i32, i32
  }
  func.func @transform_7(%arg0: i32) -> (i32, i32) {
    %c0_i32 = arith.constant 0 : i32
    %c0_i32_0 = arith.constant 0 : i32
    %c0_i32_1 = arith.constant 0 : i32
    return %c0_i32, %c0_i32_0 : i32, i32
  }
  func.func @transform_8(%arg0: i32) -> (i32, i32) {
    %c0_i32 = arith.constant 0 : i32
    %c0_i32_0 = arith.constant 0 : i32
    return %c0_i32, %arg0 : i32, i32
  }
}

</mosaic_0001>

<llo_original>
// kernel: tpu_custom_call.1
$region0: #{tpu_custom_call.1}
  #allocation0 [shape = 'u32[]', space=smem, size = 0x4, offset = 0x4, fixed_abs, tag = 'smem constant byte address 0x4 - core index']
  #allocation1 [shape = 'u32[144,128]{1,0:T(1,128)}', space=vmem, size = 0x12000, scoped, tag = 'internal scratch']
  #allocation2 [shape = 'f32[1,1]{1,0:T(1,128)S(1)}', space=vmem, size = 0x200, scoped, tag = 'scoped memory for tpu_custom_call.1']
  %s0 = inlined_call_operand.vmem [shape: f32[6,512], index: 0, kind: input, shape index: {}]
  %s1 = inlined_call_operand.vmem [shape: f32[32,1], index: 1, kind: input, shape index: {}]
  %s2 = inlined_call_operand.vmem [shape: f32[32,8], index: 2, kind: input, shape index: {}]
  %s3 = inlined_call_operand.vmem [shape: f32[32,1], index: 3, kind: input, shape index: {}]
  %s4 = inlined_call_operand.vmem [shape: f32[32,8], index: 4, kind: input, shape index: {}]
  %s5 = inlined_call_operand.vmem [shape: f32[32,1], index: 5, kind: input, shape index: {}]
  %s6 = inlined_call_operand.vmem [shape: f32[8,1], index: 6, kind: input, shape index: {}]
  %s7 = inlined_call_operand.<no memory space> [shape: f32[1,1], index: 7, kind: input, shape index: {}]
  %s8 = inlined_call_operand.hbm [shape: f32[3,512], index: 8, kind: output, shape index: {}]
  %s9 = sld [smem:[#allocation0]]
  $region65: #{tpu_custom_call.1} parent=0
    _
  %s11 = ssub.s32 1, %s9
  %s12 = scalar_select 0, %s11, %s9
  %v13 = vstv %s7
  %14 = vst [vmem:[#allocation2] sm:$0x1] %v13
  $region1: #{tpu_custom_call.1} parent=0
    #allocation3 [shape = 'u8[8192]{0}', space=vmem, size = 0x2000, scoped, tag = 'output window, operand 0']
    #allocation4 [shape = 's32[2]{0}', space=sflag, size = 0x8, scoped, tag = 'scoped memory for tpu_custom_call.1']
    %15 = vsyncpa [#allocation4], 0
    %s16 = scalar_lea.sflag [#allocation4], 1
    %17 = vsyncpa %s16, 0
    loop: start=0, step=1, limit=4
    $region2: #{tpu_custom_call.1} parent=1 // loop_pre_header
      _
    $region3: #{tpu_custom_call.1} parent=1 // loop_header
      %s19 = sphi 0, %s23
      %p20 = scmp.ge.s32.totalorder %s19, 4
      %s29 = sphi 0, %s31
      %s32 = sphi 0, %s29
      %s33 = sphi 0, %s32
      %s49 = sphi 0, %s33
      %s53 = sphi 0, %s53
      %s55 = sphi 0, %s53
      %s56 = sphi 0, %s55
      %s70 = sphi 0, %s56
      %s74 = sphi 0, %s74
      %s76 = sphi 0, %s74
      %s77 = sphi 0, %s76
      %s91 = sphi 0, %s77
      %s95 = sphi 0, %s95
      %s97 = sphi 0, %s95
      %s98 = sphi 0, %s97
      %s112 = sphi 0, %s98
      %s116 = sphi 0, %s116
      %s118 = sphi 0, %s116
      %s119 = sphi 0, %s118
      %s133 = sphi 0, %s119
      %s137 = sphi 0, %s137
      %s139 = sphi 0, %s137
      %s140 = sphi 0, %s139
      %s154 = sphi 0, %s140
      %s158 = sphi 0, %s158
      %s160 = sphi 0, %s158
      %s161 = sphi 0, %s160
      %s175 = sphi 0, %s161
      %s179 = sphi 0, %s179
      %s181 = sphi 0, %s179
      %s182 = sphi 0, %s181
      %s196 = sphi 0, %s182
      %s202 = sphi 0, %s204
      %s205 = sphi 0, %s202
      %s206 = sphi 0, %s205
      %s222 = sphi 0, %s206
    $region4: #{tpu_custom_call.1} parent=1 // loop_header_branch
      %22 = sbr.rel (%p20) target = $region8
    $region5: #{tpu_custom_call.1} parent=1 // loop_body
      %s24 = ssub.s32 %s19, 1
      %s25 = ssub.s32 %s19, 2
      %s26 = sadd.s32 %s19, 1
      %s27 = ssub.s32 %s19, %s26
      %p28 = scmp.eq.s32.totalorder %s27, 0
      %s30 = sadd.s32 %s29, 1
      %s31 = scalar_select %p28, %s29, %s30
      %p34 = pneg %p28
      %p35 = scmp.eq.s32.totalorder %s19, 1
      %p36 = por %p34, %p35
      %p37 = scmp.ne.s32.totalorder %s29, %s32
      %p38 = scmp.eq.s32.totalorder %s19, 0
      %p39 = por %p37, %p38
      %p40 = scmp.ne.s32.totalorder %s29, %s32
      %p41 = scmp.eq.s32.totalorder %s24, 1
      %p42 = por %p40, %p41
      %p43 = scmp.ne.s32.totalorder %s32, %s33
      %p44 = scmp.eq.s32.totalorder %s24, 0
      %p45 = por %p43, %p44
      %p46 = scmp.ne.s32.totalorder %s32, %s33
      %p47 = scmp.eq.s32.totalorder %s25, 1
      %p48 = por %p46, %p47
      %p50 = scmp.ne.s32.totalorder %s33, %s49
      %p51 = scmp.eq.s32.totalorder %s25, 0
      %p52 = por %p50, %p51
      %s54 = sadd.s32 %s53, 1
      %p57 = scmp.eq.s32.totalorder %s19, 1
      %p58 = scmp.ne.s32.totalorder %s53, %s55
      %p59 = scmp.eq.s32.totalorder %s19, 0
      %p60 = por %p58, %p59
      %p61 = scmp.ne.s32.totalorder %s53, %s55
      %p62 = scmp.eq.s32.totalorder %s24, 1
      %p63 = por %p61, %p62
      %p64 = scmp.ne.s32.totalorder %s55, %s56
      %p65 = scmp.eq.s32.totalorder %s24, 0
      %p66 = por %p64, %p65
      %p67 = scmp.ne.s32.totalorder %s55, %s56
      %p68 = scmp.eq.s32.totalorder %s25, 1
      %p69 = por %p67, %p68
      %p71 = scmp.ne.s32.totalorder %s56, %s70
      %p72 = scmp.eq.s32.totalorder %s25, 0
      %p73 = por %p71, %p72
      %s75 = sadd.s32 %s74, 1
      %p78 = scmp.eq.s32.totalorder %s19, 1
      %p79 = scmp.ne.s32.totalorder %s74, %s76
      %p80 = scmp.eq.s32.totalorder %s19, 0
      %p81 = por %p79, %p80
      %p82 = scmp.ne.s32.totalorder %s74, %s76
      %p83 = scmp.eq.s32.totalorder %s24, 1
      %p84 = por %p82, %p83
      %p85 = scmp.ne.s32.totalorder %s76, %s77
      %p86 = scmp.eq.s32.totalorder %s24, 0
      %p87 = por %p85, %p86
      %p88 = scmp.ne.s32.totalorder %s76, %s77
      %p89 = scmp.eq.s32.totalorder %s25, 1
      %p90 = por %p88, %p89
      %p92 = scmp.ne.s32.totalorder %s77, %s91
      %p93 = scmp.eq.s32.totalorder %s25, 0
      %p94 = por %p92, %p93
      %s96 = sadd.s32 %s95, 1
      %p99 = scmp.eq.s32.totalorder %s19, 1
      %p100 = scmp.ne.s32.totalorder %s95, %s97
      %p101 = scmp.eq.s32.totalorder %s19, 0
      %p102 = por %p100, %p101
      %p103 = scmp.ne.s32.totalorder %s95, %s97
      %p104 = scmp.eq.s32.totalorder %s24, 1
      %p105 = por %p103, %p104
      %p106 = scmp.ne.s32.totalorder %s97, %s98
      %p107 = scmp.eq.s32.totalorder %s24, 0
      %p108 = por %p106, %p107
      %p109 = scmp.ne.s32.totalorder %s97, %s98
      %p110 = scmp.eq.s32.totalorder %s25, 1
      %p111 = por %p109, %p110
      %p113 = scmp.ne.s32.totalorder %s98, %s112
      %p114 = scmp.eq.s32.totalorder %s25, 0
      %p115 = por %p113, %p114
      %s117 = sadd.s32 %s116, 1
      %p120 = scmp.eq.s32.totalorder %s19, 1
      %p121 = scmp.ne.s32.totalorder %s116, %s118
      %p122 = scmp.eq.s32.totalorder %s19, 0
      %p123 = por %p121, %p122
      %p124 = scmp.ne.s32.totalorder %s116, %s118
      %p125 = scmp.eq.s32.totalorder %s24, 1
      %p126 = por %p124, %p125
      %p127 = scmp.ne.s32.totalorder %s118, %s119
      %p128 = scmp.eq.s32.totalorder %s24, 0
      %p129 = por %p127, %p128
      %p130 = scmp.ne.s32.totalorder %s118, %s119
      %p131 = scmp.eq.s32.totalorder %s25, 1
      %p132 = por %p130, %p131
      %p134 = scmp.ne.s32.totalorder %s119, %s133
      %p135 = scmp.eq.s32.totalorder %s25, 0
      %p136 = por %p134, %p135
      %s138 = sadd.s32 %s137, 1
      %p141 = scmp.eq.s32.totalorder %s19, 1
      %p142 = scmp.ne.s32.totalorder %s137, %s139
      %p143 = scmp.eq.s32.totalorder %s19, 0
      %p144 = por %p142, %p143
      %p145 = scmp.ne.s32.totalorder %s137, %s139
      %p146 = scmp.eq.s32.totalorder %s24, 1
      %p147 = por %p145, %p146
      %p148 = scmp.ne.s32.totalorder %s139, %s140
      %p149 = scmp.eq.s32.totalorder %s24, 0
      %p150 = por %p148, %p149
      %p151 = scmp.ne.s32.totalorder %s139, %s140
      %p152 = scmp.eq.s32.totalorder %s25, 1
      %p153 = por %p151, %p152
      %p155 = scmp.ne.s32.totalorder %s140, %s154
      %p156 = scmp.eq.s32.totalorder %s25, 0
      %p157 = por %p155, %p156
      %s159 = sadd.s32 %s158, 1
      %p162 = scmp.eq.s32.totalorder %s19, 1
      %p163 = scmp.ne.s32.totalorder %s158, %s160
      %p164 = scmp.eq.s32.totalorder %s19, 0
      %p165 = por %p163, %p164
      %p166 = scmp.ne.s32.totalorder %s158, %s160
      %p167 = scmp.eq.s32.totalorder %s24, 1
      %p168 = por %p166, %p167
      %p169 = scmp.ne.s32.totalorder %s160, %s161
      %p170 = scmp.eq.s32.totalorder %s24, 0
      %p171 = por %p169, %p170
      %p172 = scmp.ne.s32.totalorder %s160, %s161
      %p173 = scmp.eq.s32.totalorder %s25, 1
      %p174 = por %p172, %p173
      %p176 = scmp.ne.s32.totalorder %s161, %s175
      %p177 = scmp.eq.s32.totalorder %s25, 0
      %p178 = por %p176, %p177
      %s180 = sadd.s32 %s179, 1
      %p183 = scmp.eq.s32.totalorder %s19, 1
      %p184 = scmp.ne.s32.totalorder %s179, %s181
      %p185 = scmp.eq.s32.totalorder %s19, 0
      %p186 = por %p184, %p185
      %p187 = scmp.ne.s32.totalorder %s179, %s181
      %p188 = scmp.eq.s32.totalorder %s24, 1
      %p189 = por %p187, %p188
      %p190 = scmp.ne.s32.totalorder %s181, %s182
      %p191 = scmp.eq.s32.totalorder %s24, 0
      %p192 = por %p190, %p191
      %p193 = scmp.ne.s32.totalorder %s181, %s182
      %p194 = scmp.eq.s32.totalorder %s25, 1
      %p195 = por %p193, %p194
      %p197 = scmp.ne.s32.totalorder %s182, %s196
      %p198 = scmp.eq.s32.totalorder %s25, 0
      %p199 = por %p197, %p198
      %s200 = ssub.s32 %s19, %s26
      %p201 = scmp.eq.s32.totalorder %s200, 0
      %s203 = sadd.s32 %s202, 1
      %s204 = scalar_select %p201, %s202, %s203
      %p207 = pneg %p201
      %p208 = scmp.eq.s32.totalorder %s19, 1
      %p209 = por %p207, %p208
      %p210 = scmp.ne.s32.totalorder %s202, %s205
      %p211 = scmp.eq.s32.totalorder %s19, 0
      %p212 = por %p210, %p211
      %p213 = scmp.ne.s32.totalorder %s202, %s205
      %p214 = scmp.eq.s32.totalorder %s24, 1
      %p215 = por %p213, %p214
      %p216 = scmp.ne.s32.totalorder %s205, %s206
      %p217 = scmp.eq.s32.totalorder %s24, 0
      %p218 = por %p216, %p217
      %p219 = scmp.ne.s32.totalorder %s205, %s206
      %p220 = scmp.eq.s32.totalorder %s25, 1
      %p221 = por %p219, %p220
      %p223 = scmp.ne.s32.totalorder %s206, %s222
      %p224 = scmp.eq.s32.totalorder %s25, 0
      %p225 = por %p223, %p224
      %p226 = scmp.le.s32.totalorder 1, %s19
      %p227 = scmp.lt.s32.totalorder %s19, 3
      %p228 = pnand %p226, %p227
      %p229 = pneg %p228
      // Predicated region
      $region9: #{tpu_custom_call.1} parent=5 // pred_check
        _
      $region10: #{tpu_custom_call.1} parent=5 // pred_check_branch
        %231 = sbr.rel (%p228) target = $region12
      $region11: #{tpu_custom_call.1} parent=5 // pred_region
        %s232 = ssub.s32 %s19, 1
        // Predicated region
        $region13: #{tpu_custom_call.1} parent=11 // pred_check
          %p233 = pneg %p66
        $region14: #{tpu_custom_call.1} parent=11 // pred_check_branch
          %235 = sbr.rel (%p233) target = $region16
        $region15: #{tpu_custom_call.1} parent=11 // pred_region
          _
        $region16: #{tpu_custom_call.1} parent=11 // pred_fallthru
          _
        // Predicated region
        $region17: #{tpu_custom_call.1} parent=11 // pred_check
          %p236 = pneg %p87
        $region18: #{tpu_custom_call.1} parent=11 // pred_check_branch
          %238 = sbr.rel (%p236) target = $region20
        $region19: #{tpu_custom_call.1} parent=11 // pred_region
          _
        $region20: #{tpu_custom_call.1} parent=11 // pred_fallthru
          _
        // Predicated region
        $region21: #{tpu_custom_call.1} parent=11 // pred_check
          %p239 = pneg %p108
        $region22: #{tpu_custom_call.1} parent=11 // pred_check_branch
          %241 = sbr.rel (%p239) target = $region24
        $region23: #{tpu_custom_call.1} parent=11 // pred_region
          _
        $region24: #{tpu_custom_call.1} parent=11 // pred_fallthru
          _
        // Predicated region
        $region25: #{tpu_custom_call.1} parent=11 // pred_check
          %p242 = pneg %p129
        $region26: #{tpu_custom_call.1} parent=11 // pred_check_branch
          %244 = sbr.rel (%p242) target = $region28
        $region27: #{tpu_custom_call.1} parent=11 // pred_region
          _
        $region28: #{tpu_custom_call.1} parent=11 // pred_fallthru
          _
        // Predicated region
        $region29: #{tpu_custom_call.1} parent=11 // pred_check
          %p245 = pneg %p150
        $region30: #{tpu_custom_call.1} parent=11 // pred_check_branch
          %247 = sbr.rel (%p245) target = $region32
        $region31: #{tpu_custom_call.1} parent=11 // pred_region
          _
        $region32: #{tpu_custom_call.1} parent=11 // pred_fallthru
          _
        // Predicated region
        $region33: #{tpu_custom_call.1} parent=11 // pred_check
          %p248 = pneg %p171
        $region34: #{tpu_custom_call.1} parent=11 // pred_check_branch
          %250 = sbr.rel (%p248) target = $region36
        $region35: #{tpu_custom_call.1} parent=11 // pred_region
          _
        $region36: #{tpu_custom_call.1} parent=11 // pred_fallthru
          _
        // Predicated region
        $region37: #{tpu_custom_call.1} parent=11 // pred_check
          %p251 = pneg %p192
        $region38: #{tpu_custom_call.1} parent=11 // pred_check_branch
          %253 = sbr.rel (%p251) target = $region40
        $region39: #{tpu_custom_call.1} parent=11 // pred_region
          _
        $region40: #{tpu_custom_call.1} parent=11 // pred_fallthru
          _
      $region12: #{tpu_custom_call.1} parent=5 // pred_fallthru
        _
      %p254 = scmp.lt.s32.totalorder %s19, 2
      // Predicated region
      $region41: #{tpu_custom_call.1} parent=5 // pred_check
        %p255 = pneg %p254
      $region42: #{tpu_custom_call.1} parent=5 // pred_check_branch
        %257 = sbr.rel (%p255) target = $region44
      $region43: #{tpu_custom_call.1} parent=5 // pred_region
        // Predicated region
        $region45: #{tpu_custom_call.1} parent=43 // pred_check
          %p258 = pneg %p39
        $region46: #{tpu_custom_call.1} parent=43 // pred_check_branch
          %260 = sbr.rel (%p258) target = $region48
        $region47: #{tpu_custom_call.1} parent=43 // pred_region
          %s261 = smul.u32 2, %s19
          %p262 = scmp.lt.s32.totalorder %s261, 3
          %s263 = scalar_select %p262, %s261, 3
          %s264 = smul.addr %s263, 8
          %s265 = scalar_lea.vmem %s0, %s264
          %s266 = smul.u32 2, %s19
        $region48: #{tpu_custom_call.1} parent=43 // pred_fallthru
          _
      $region44: #{tpu_custom_call.1} parent=5 // pred_fallthru
        _
      %p267 = scmp.le.s32.totalorder 1, %s19
      %p268 = scmp.lt.s32.totalorder %s19, 3
      %p269 = pnand %p267, %p268
      %p270 = pneg %p269
      // Predicated region
      $region49: #{tpu_custom_call.1} parent=5 // pred_check
        _
      $region50: #{tpu_custom_call.1} parent=5 // pred_check_branch
        %272 = sbr.rel (%p269) target = $region52
      $region51: #{tpu_custom_call.1} parent=5 // pred_region
        %s273 = ssub.s32 %s19, 1
        %s274 = smul.u32 2, %s24
        %p275 = scmp.lt.s32.totalorder %s274, 3
        %s276 = scalar_select %p275, %s274, 3
        %s277 = smul.addr %s276, 8
        %s278 = scalar_lea.vmem %s0, %s277
        %p279 = pneg %p45
        %p280 = pneg %p42
        %p281 = pneg %p66
        %p282 = pneg %p63
        %p283 = pneg %p87
        %p284 = pneg %p84
        %p285 = pneg %p108
        %p286 = pneg %p105
        %p287 = pneg %p129
        %p288 = pneg %p126
        %p289 = pneg %p150
        %p290 = pneg %p147
        %p291 = pneg %p171
        %p292 = pneg %p168
        %p293 = pneg %p192
        %p294 = pneg %p189
        %p295 = pneg %p218
        %p296 = pneg %p215
        %s297 = sand.u32 %s205, 1
        %s298 = scalar_lea.sflag [#allocation4], %s297
        %s299 = sand.u32 %s205, 1
        %s300 = smul.addr %s299, 8
        %s301 = scalar_lea.vmem [#allocation3], %s300
        %s302 = smul.u32 2, %s24
        %p303 = scmp.lt.s32.totalorder %s302, 3
        %s304 = scalar_select %p303, %s302, 3
        %s305 = smul.addr %s304, 8
        %s306 = scalar_lea.vmem %s0, %s305
        %s307 = smul.u32 2, %s24
        %s308 = smul.u32 2, %s24
        %v309 = vld [vmem:[%s1] sm:$0xff]
        %v310 = vld [vmem:[%s1 + $0x8] sm:$0xff]
        %v311 = vld [vmem:[%s1 + $0x10] sm:$0xff]
        %v312 = vld [vmem:[%s1 + $0x18] sm:$0xff]
        %v313 = vld [vmem:[%s2] sm:$0xff]
        %v314 = vld [vmem:[%s2 + $0x8] sm:$0xff]
        %v315 = vld [vmem:[%s2 + $0x10] sm:$0xff]
        %v316 = vld [vmem:[%s2 + $0x18] sm:$0xff]
        %v317 = vld [vmem:[%s3] sm:$0xff]
        %v318 = vld [vmem:[%s3 + $0x8] sm:$0xff]
        %v319 = vld [vmem:[%s3 + $0x10] sm:$0xff]
        %v320 = vld [vmem:[%s3 + $0x18] sm:$0xff]
        %v321 = vld [vmem:[%s4] sm:$0xff]
        %v322 = vld [vmem:[%s4 + $0x8] sm:$0xff]
        %v323 = vld [vmem:[%s4 + $0x10] sm:$0xff]
        %v324 = vld [vmem:[%s4 + $0x18] sm:$0xff]
        %v325 = vld [vmem:[%s5] sm:$0xff]
        %v326 = vld [vmem:[%s5 + $0x8] sm:$0xff]
        %v327 = vld [vmem:[%s5 + $0x10] sm:$0xff]
        %v328 = vld [vmem:[%s5 + $0x18] sm:$0xff]
        %v329 = vld [vmem:[%s6] sm:$0xff]
        %v330 = vld [vmem:[#allocation2] sm:$0x1]
        %v331 = vld [vmem:[%s306] ss:$8 sm:$0x3]
        %333 = vset.pattern.permute.xlu0 0
        %334 = vperm.xlu0 %333, %v309
        %v335 = vpop.permute.xlu0 %334
        %338 = vset.pattern.permute.xlu0 0
        %339 = vperm.xlu0 %338, %v310
        %v340 = vpop.permute.xlu0 %339
        %343 = vset.pattern.permute.xlu0 0
        %344 = vperm.xlu0 %343, %v311
        %v345 = vpop.permute.xlu0 %344
        %348 = vset.pattern.permute.xlu0 0
        %349 = vperm.xlu0 %348, %v312
        %v350 = vpop.permute.xlu0 %349
        %v353 = vlaneseq
        %v354 = vshrl.u32 %v353, 7
        %v355 = vsub.s32 0, %v354
        %v356 = vrot.slane %v331, %v355
        %v357 = vlaneseq
        %v358 = vshrl.u32 %v357, 7
        %v359 = vsub.s32 1, %v358
        %v360 = vrot.slane %v331, %v359
        %v363 = vmul.f32 %v335, %v356
        %v364 = vmul.f32 %v335, %v360
        %v365 = vmul.f32 %v340, %v356
        %v366 = vmul.f32 %v340, %v360
        %v367 = vmul.f32 %v345, %v356
        %v368 = vmul.f32 %v345, %v360
        %v369 = vmul.f32 %v350, %v356
        %v370 = vmul.f32 %v350, %v360
        %vm371 = vcmask 64512
        %v373 = vsel %vm371, %v313, 0
        %v376 = vsel %vm371, %v314, 0
        %v379 = vsel %vm371, %v315, 0
        %v382 = vsel %vm371, %v316, 0
        %384 = vmatprep.subr.mxu0 0.0
        %385 = vmatpush1.msra.mxu0 0.0
        %386 = vmatprep.subr.mxu0 0.0
        %387 = vmatpush1.msra.mxu0 0.0
        %388 = vmatprep.subr.mxu0 0.0
        %389 = vmatpush1.msra.mxu0 0.0
        %390 = vmatprep.subr.mxu0 0.0
        %391 = vmatpush1.msra.mxu0 0.0
        %392 = vmatprep.subr.mxu0 0.0
        %393 = vmatpush1.msra.mxu0 0.0
        %394 = vmatprep.subr.mxu0 0.0
        %395 = vmatpush1.msra.mxu0 0.0
        %396 = vmatprep.subr.mxu0 0.0
        %397 = vmatpush1.msra.mxu0 0.0
        %398 = vmatprep.subr.mxu0 0.0
        %399 = vmatpush1.msra.mxu0 0.0
        %400 = vmatprep.subr.mxu0 0.0
        %401 = vmatpush1.msra.mxu0 0.0
        %402 = vmatprep.subr.mxu0 0.0
        %403 = vmatpush1.msra.mxu0 0.0
        %404 = vmatprep.subr.mxu0 0.0
        %405 = vmatpush1.msra.mxu0 0.0
        %406 = vmatprep.subr.mxu0 0.0
        %407 = vmatpush1.msra.mxu0 0.0
        %408 = vmatprep.subr.mxu0 0.0
        %409 = vmatpush1.msra.mxu0 0.0
        %410 = vmatprep.subr.mxu0 0.0
        %411 = vmatpush1.msra.mxu0 0.0
        %412 = vmatprep.subr.mxu0 0.0
        %413 = vmatpush1.msra.mxu0 0.0
        %414 = vmatprep.subr.mxu0 0.0
        %415 = vmatpush1.msra.mxu0 0.0
        %416 = vmatprep.subr.mxu0 0.0
        %417 = vmatpush1.msra.mxu0 0.0
        %418 = vmatprep.subr.mxu0 0.0
        %419 = vmatpush1.msra.mxu0 0.0
        %420 = vmatprep.subr.mxu0 0.0
        %421 = vmatpush1.msra.mxu0 0.0
        %422 = vmatprep.subr.mxu0 0.0
        %423 = vmatpush1.msra.mxu0 0.0
        %424 = vmatprep.subr.mxu0 0.0
        %425 = vmatpush1.msra.mxu0 0.0
        %426 = vmatprep.subr.mxu0 0.0
        %427 = vmatpush1.msra.mxu0 0.0
        %428 = vmatprep.subr.mxu0 0.0
        %429 = vmatpush1.msra.mxu0 0.0
        %430 = vmatprep.subr.mxu0 0.0
        %431 = vmatpush1.msra.mxu0 0.0
        %432 = vmatprep.subr.mxu0 0.0
        %433 = vmatpush1.msra.mxu0 0.0
        %434 = vmatprep.subr.mxu0 0.0
        %435 = vmatpush1.msra.mxu0 0.0
        %436 = vmatprep.subr.mxu0 0.0
        %437 = vmatpush1.msra.mxu0 0.0
        %438 = vmatprep.subr.mxu0 0.0
        %439 = vmatpush1.msra.mxu0 0.0
        %440 = vmatprep.subr.mxu0 0.0
        %441 = vmatpush1.msra.mxu0 0.0
        %442 = vmatprep.subr.mxu0 0.0
        %443 = vmatpush1.msra.mxu0 0.0
        %444 = vmatprep.subr.mxu0 0.0
        %445 = vmatpush1.msra.mxu0 0.0
        %446 = vmatprep.subr.mxu0 0.0
        %447 = vmatpush1.msra.mxu0 0.0
        %448 = vmatprep.mubr.f32.mxu0 0.0
        %449 = vmatmul.mubr.f32.gmra.mrb[0].mxu0 %v373
        %v450 = vpop.f32.mrb[0].mxu0
        %v451 = vadd.f32 0.0, %v450
        %v452 = vpop.f32.mrb[0].mxu0
        %v453 = vadd.f32 0.0, %v452
        %454 = vmatprep.mubr.f32.mxu0 0.0
        %455 = vmatmul.mubr.f32.gmra.mrb[0].mxu0 %v376
        %v456 = vpop.f32.mrb[0].mxu0
        %v457 = vadd.f32 0.0, %v456
        %v458 = vpop.f32.mrb[0].mxu0
        %v459 = vadd.f32 0.0, %v458
        %460 = vmatprep.mubr.f32.mxu0 0.0
        %461 = vmatmul.mubr.f32.gmra.mrb[0].mxu0 %v379
        %v462 = vpop.f32.mrb[0].mxu0
        %v463 = vadd.f32 0.0, %v462
        %v464 = vpop.f32.mrb[0].mxu0
        %v465 = vadd.f32 0.0, %v464
        %466 = vmatprep.mubr.f32.mxu0 0.0
        %467 = vmatmul.mubr.f32.gmra.mrb[0].mxu0 %v382
        %v468 = vpop.f32.mrb[0].mxu0
        %v469 = vadd.f32 0.0, %v468
        %v470 = vpop.f32.mrb[0].mxu0
        %v471 = vadd.f32 0.0, %v470
        %472 = vdwg.mxu0
        %v473 = vadd.f32 %v363, %v451
        %v474 = vadd.f32 %v364, %v453
        %v475 = vadd.f32 %v365, %v457
        %v476 = vadd.f32 %v366, %v459
        %v477 = vadd.f32 %v367, %v463
        %v478 = vadd.f32 %v368, %v465
        %v479 = vadd.f32 %v369, %v469
        %v480 = vadd.f32 %v370, %v471
        %482 = vset.pattern.permute.xlu0 0
        %483 = vperm.xlu0 %482, %v317
        %v484 = vpop.permute.xlu0 %483
        %487 = vset.pattern.permute.xlu0 0
        %488 = vperm.xlu0 %487, %v318
        %v489 = vpop.permute.xlu0 %488
        %492 = vset.pattern.permute.xlu0 0
        %493 = vperm.xlu0 %492, %v319
        %v494 = vpop.permute.xlu0 %493
        %497 = vset.pattern.permute.xlu0 0
        %498 = vperm.xlu0 %497, %v320
        %v499 = vpop.permute.xlu0 %498
        %v501 = vadd.f32 %v473, %v484
        %v502 = vadd.f32 %v474, %v484
        %v503 = vadd.f32 %v475, %v489
        %v504 = vadd.f32 %v476, %v489
        %v505 = vadd.f32 %v477, %v494
        %v506 = vadd.f32 %v478, %v494
        %v507 = vadd.f32 %v479, %v499
        %v508 = vadd.f32 %v480, %v499
        %v509 = vtanh.pop %v501
        %v510 = vtanh.pop %v502
        %v511 = vmul.f32 %v509, 0.5
        %v512 = vmul.f32 %v510, 0.5
        %v513 = vadd.f32 %v511, 0.5
        %v514 = vadd.f32 %v512, 0.5
        %v515 = vtanh.pop %v503
        %v516 = vtanh.pop %v504
        %v517 = vmul.f32 %v515, 0.5
        %v518 = vmul.f32 %v516, 0.5
        %v519 = vadd.f32 %v517, 0.5
        %v520 = vadd.f32 %v518, 0.5
        %v521 = vtanh.pop %v505
        %v522 = vtanh.pop %v506
        %v523 = vtanh.pop %v507
        %v524 = vtanh.pop %v508
        %v525 = vmul.f32 %v523, 0.5
        %v526 = vmul.f32 %v524, 0.5
        %v527 = vadd.f32 %v525, 0.5
        %v528 = vadd.f32 %v526, 0.5
        %v529 = vmul.f32 %v519, 0.0
        %v530 = vmul.f32 %v520, 0.0
        %v531 = vmul.f32 %v513, %v521
        %v532 = vmul.f32 %v514, %v522
        %v533 = vadd.f32 %v529, %v531
        %v534 = vadd.f32 %v530, %v532
        %v535 = vtanh.pop %v533
        %v536 = vtanh.pop %v534
        %v537 = vmul.f32 %v527, %v535
        %v538 = vmul.f32 %v528, %v536
        %s539 = scalar_lea.vmem %s306, 1
        %v540 = vld [vmem:[%s539] ss:$8 sm:$0x3]
        %v542 = vlaneseq
        %v543 = vshrl.u32 %v542, 7
        %v544 = vsub.s32 0, %v543
        %v545 = vrot.slane %v540, %v544
        %v546 = vlaneseq
        %v547 = vshrl.u32 %v546, 7
        %v548 = vsub.s32 1, %v547
        %v549 = vrot.slane %v540, %v548
        %v552 = vmul.f32 %v335, %v545
        %v553 = vmul.f32 %v335, %v549
        %v554 = vmul.f32 %v340, %v545
        %v555 = vmul.f32 %v340, %v549
        %v556 = vmul.f32 %v345, %v545
        %v557 = vmul.f32 %v345, %v549
        %v558 = vmul.f32 %v350, %v545
        %v559 = vmul.f32 %v350, %v549
        %560 = vmatprep.subr.mxu0 %v538
        %561 = vmatpush1.msra.mxu0 %v537
        %562 = vmatprep.subr.mxu0 0.0
        %563 = vmatpush1.msra.mxu0 0.0
        %564 = vmatprep.subr.mxu0 0.0
        %565 = vmatpush1.msra.mxu0 0.0
        %566 = vmatprep.subr.mxu0 0.0
        %567 = vmatpush1.msra.mxu0 0.0
        %568 = vmatprep.subr.mxu0 0.0
        %569 = vmatpush1.msra.mxu0 0.0
        %570 = vmatprep.subr.mxu0 0.0
        %571 = vmatpush1.msra.mxu0 0.0
        %572 = vmatprep.subr.mxu0 0.0
        %573 = vmatpush1.msra.mxu0 0.0
        %574 = vmatprep.subr.mxu0 0.0
        %575 = vmatpush1.msra.mxu0 0.0
        %576 = vmatprep.subr.mxu0 0.0
        %577 = vmatpush1.msra.mxu0 0.0
        %578 = vmatprep.subr.mxu0 0.0
        %579 = vmatpush1.msra.mxu0 0.0
        %580 = vmatprep.subr.mxu0 0.0
        %581 = vmatpush1.msra.mxu0 0.0
        %582 = vmatprep.subr.mxu0 0.0
        %583 = vmatpush1.msra.mxu0 0.0
        %584 = vmatprep.subr.mxu0 0.0
        %585 = vmatpush1.msra.mxu0 0.0
        %586 = vmatprep.subr.mxu0 0.0
        %587 = vmatpush1.msra.mxu0 0.0
        %588 = vmatprep.subr.mxu0 0.0
        %589 = vmatpush1.msra.mxu0 0.0
        %590 = vmatprep.subr.mxu0 0.0
        %591 = vmatpush1.msra.mxu0 0.0
        %592 = vmatprep.subr.mxu0 0.0
        %593 = vmatpush1.msra.mxu0 0.0
        %594 = vmatprep.subr.mxu0 0.0
        %595 = vmatpush1.msra.mxu0 0.0
        %596 = vmatprep.subr.mxu0 0.0
        %597 = vmatpush1.msra.mxu0 0.0
        %598 = vmatprep.subr.mxu0 0.0
        %599 = vmatpush1.msra.mxu0 0.0
        %600 = vmatprep.subr.mxu0 0.0
        %601 = vmatpush1.msra.mxu0 0.0
        %602 = vmatprep.subr.mxu0 0.0
        %603 = vmatpush1.msra.mxu0 0.0
        %604 = vmatprep.subr.mxu0 0.0
        %605 = vmatpush1.msra.mxu0 0.0
        %606 = vmatprep.subr.mxu0 0.0
        %607 = vmatpush1.msra.mxu0 0.0
        %608 = vmatprep.subr.mxu0 0.0
        %609 = vmatpush1.msra.mxu0 0.0
        %610 = vmatprep.subr.mxu0 0.0
        %611 = vmatpush1.msra.mxu0 0.0
        %612 = vmatprep.subr.mxu0 0.0
        %613 = vmatpush1.msra.mxu0 0.0
        %614 = vmatprep.subr.mxu0 0.0
        %615 = vmatpush1.msra.mxu0 0.0
        %616 = vmatprep.subr.mxu0 0.0
        %617 = vmatpush1.msra.mxu0 0.0
        %618 = vmatprep.subr.mxu0 0.0
        %619 = vmatpush1.msra.mxu0 0.0
        %620 = vmatprep.subr.mxu0 0.0
        %621 = vmatpush1.msra.mxu0 0.0
        %622 = vmatprep.subr.mxu0 0.0
        %623 = vmatpush1.msra.mxu0 0.0
        %624 = vmatprep.mubr.f32.mxu0 0.0
        %625 = vmatmul.mubr.f32.gmra.mrb[0].mxu0 %v373
        %v626 = vpop.f32.mrb[0].mxu0
        %v627 = vadd.f32 0.0, %v626
        %v628 = vpop.f32.mrb[0].mxu0
        %v629 = vadd.f32 0.0, %v628
        %630 = vmatprep.mubr.f32.mxu0 0.0
        %631 = vmatmul.mubr.f32.gmra.mrb[0].mxu0 %v376
        %v632 = vpop.f32.mrb[0].mxu0
        %v633 = vadd.f32 0.0, %v632
        %v634 = vpop.f32.mrb[0].mxu0
        %v635 = vadd.f32 0.0, %v634
        %636 = vmatprep.mubr.f32.mxu0 0.0
        %637 = vmatmul.mubr.f32.gmra.mrb[0].mxu0 %v379
        %v638 = vpop.f32.mrb[0].mxu0
        %v639 = vadd.f32 0.0, %v638
        %v640 = vpop.f32.mrb[0].mxu0
        %v641 = vadd.f32 0.0, %v640
        %642 = vmatprep.mubr.f32.mxu0 0.0
        %643 = vmatmul.mubr.f32.gmra.mrb[0].mxu0 %v382
        %v644 = vpop.f32.mrb[0].mxu0
        %v645 = vadd.f32 0.0, %v644
        %v646 = vpop.f32.mrb[0].mxu0
        %v647 = vadd.f32 0.0, %v646
        %648 = vdwg.mxu0
        %v649 = vadd.f32 %v552, %v627
        %v650 = vadd.f32 %v553, %v629
        %v651 = vadd.f32 %v554, %v633
        %v652 = vadd.f32 %v555, %v635
        %v653 = vadd.f32 %v556, %v639
        %v654 = vadd.f32 %v557, %v641
        %v655 = vadd.f32 %v558, %v645
        %v656 = vadd.f32 %v559, %v647
        %v657 = vadd.f32 %v649, %v484
        %v658 = vadd.f32 %v650, %v484
        %v659 = vadd.f32 %v651, %v489
        %v660 = vadd.f32 %v652, %v489
        %v661 = vadd.f32 %v653, %v494
        %v662 = vadd.f32 %v654, %v494
        %v663 = vadd.f32 %v655, %v499
        %v664 = vadd.f32 %v656, %v499
        %v665 = vtanh.pop %v657
        %v666 = vtanh.pop %v658
        %v667 = vmul.f32 %v665, 0.5
        %v668 = vmul.f32 %v666, 0.5
        %v669 = vadd.f32 %v667, 0.5
        %v670 = vadd.f32 %v668, 0.5
        %v671 = vtanh.pop %v659
        %v672 = vtanh.pop %v660
        %v673 = vmul.f32 %v671, 0.5
        %v674 = vmul.f32 %v672, 0.5
        %v675 = vadd.f32 %v673, 0.5
        %v676 = vadd.f32 %v674, 0.5
        %v677 = vtanh.pop %v661
        %v678 = vtanh.pop %v662
        %v679 = vtanh.pop %v663
        %v680 = vtanh.pop %v664
        %v681 = vmul.f32 %v679, 0.5
        %v682 = vmul.f32 %v680, 0.5
        %v683 = vadd.f32 %v681, 0.5
        %v684 = vadd.f32 %v682, 0.5
        %v685 = vmul.f32 %v675, %v533
        %v686 = vmul.f32 %v676, %v534
        %v687 = vmul.f32 %v669, %v677
        %v688 = vmul.f32 %v670, %v678
        %v689 = vadd.f32 %v685, %v687
        %v690 = vadd.f32 %v686, %v688
        %v691 = vtanh.pop %v689
        %v692 = vtanh.pop %v690
        %v693 = vmul.f32 %v683, %v691
        %v694 = vmul.f32 %v684, %v692
        %s695 = scalar_lea.vmem %s306, 2
        %v696 = vld [vmem:[%s695] ss:$8 sm:$0x3]
        %v698 = vlaneseq
        %v699 = vshrl.u32 %v698, 7
        %v700 = vsub.s32 0, %v699
        %v701 = vrot.slane %v696, %v700
        %v702 = vlaneseq
        %v703 = vshrl.u32 %v702, 7
        %v704 = vsub.s32 1, %v703
        %v705 = vrot.slane %v696, %v704
        %v708 = vmul.f32 %v335, %v701
        %v709 = vmul.f32 %v335, %v705
        %v710 = vmul.f32 %v340, %v701
        %v711 = vmul.f32 %v340, %v705
        %v712 = vmul.f32 %v345, %v701
        %v713 = vmul.f32 %v345, %v705
        %v714 = vmul.f32 %v350, %v701
        %v715 = vmul.f32 %v350, %v705
        %716 = vmatprep.subr.mxu0 %v694
        %717 = vmatpush1.msra.mxu0 %v693
        %718 = vmatprep.subr.mxu0 0.0
        %719 = vmatpush1.msra.mxu0 0.0
        %720 = vmatprep.subr.mxu0 0.0
        %721 = vmatpush1.msra.mxu0 0.0
        %722 = vmatprep.subr.mxu0 0.0
        %723 = vmatpush1.msra.mxu0 0.0
        %724 = vmatprep.subr.mxu0 0.0
        %725 = vmatpush1.msra.mxu0 0.0
        %726 = vmatprep.subr.mxu0 0.0
        %727 = vmatpush1.msra.mxu0 0.0
        %728 = vmatprep.subr.mxu0 0.0
        %729 = vmatpush1.msra.mxu0 0.0
        %730 = vmatprep.subr.mxu0 0.0
        %731 = vmatpush1.msra.mxu0 0.0
        %732 = vmatprep.subr.mxu0 0.0
        %733 = vmatpush1.msra.mxu0 0.0
        %734 = vmatprep.subr.mxu0 0.0
        %735 = vmatpush1.msra.mxu0 0.0
        %736 = vmatprep.subr.mxu0 0.0
        %737 = vmatpush1.msra.mxu0 0.0
        %738 = vmatprep.subr.mxu0 0.0
        %739 = vmatpush1.msra.mxu0 0.0
        %740 = vmatprep.subr.mxu0 0.0
        %741 = vmatpush1.msra.mxu0 0.0
        %742 = vmatprep.subr.mxu0 0.0
        %743 = vmatpush1.msra.mxu0 0.0
        %744 = vmatprep.subr.mxu0 0.0
        %745 = vmatpush1.msra.mxu0 0.0
        %746 = vmatprep.subr.mxu0 0.0
        %747 = vmatpush1.msra.mxu0 0.0
        %748 = vmatprep.subr.mxu0 0.0
        %749 = vmatpush1.msra.mxu0 0.0
        %750 = vmatprep.subr.mxu0 0.0
        %751 = vmatpush1.msra.mxu0 0.0
        %752 = vmatprep.subr.mxu0 0.0
        %753 = vmatpush1.msra.mxu0 0.0
        %754 = vmatprep.subr.mxu0 0.0
        %755 = vmatpush1.msra.mxu0 0.0
        %756 = vmatprep.subr.mxu0 0.0
        %757 = vmatpush1.msra.mxu0 0.0
        %758 = vmatprep.subr.mxu0 0.0
        %759 = vmatpush1.msra.mxu0 0.0
        %760 = vmatprep.subr.mxu0 0.0
        %761 = vmatpush1.msra.mxu0 0.0
        %762 = vmatprep.subr.mxu0 0.0
        %763 = vmatpush1.msra.mxu0 0.0
        %764 = vmatprep.subr.mxu0 0.0
        %765 = vmatpush1.msra.mxu0 0.0
        %766 = vmatprep.subr.mxu0 0.0
        %767 = vmatpush1.msra.mxu0 0.0
        %768 = vmatprep.subr.mxu0 0.0
        %769 = vmatpush1.msra.mxu0 0.0
        %770 = vmatprep.subr.mxu0 0.0
        %771 = vmatpush1.msra.mxu0 0.0
        %772 = vmatprep.subr.mxu0 0.0
        %773 = vmatpush1.msra.mxu0 0.0
        %774 = vmatprep.subr.mxu0 0.0
        %775 = vmatpush1.msra.mxu0 0.0
        %776 = vmatprep.subr.mxu0 0.0
        %777 = vmatpush1.msra.mxu0 0.0
        %778 = vmatprep.subr.mxu0 0.0
        %779 = vmatpush1.msra.mxu0 0.0
        %780 = vmatprep.mubr.f32.mxu0 0.0
        %781 = vmatmul.mubr.f32.gmra.mrb[0].mxu0 %v373
        %v782 = vpop.f32.mrb[0].mxu0
        %v783 = vadd.f32 0.0, %v782
        %v784 = vpop.f32.mrb[0].mxu0
        %v785 = vadd.f32 0.0, %v784
        %786 = vmatprep.mubr.f32.mxu0 0.0
        %787 = vmatmul.mubr.f32.gmra.mrb[0].mxu0 %v376
        %v788 = vpop.f32.mrb[0].mxu0
        %v789 = vadd.f32 0.0, %v788
        %v790 = vpop.f32.mrb[0].mxu0
        %v791 = vadd.f32 0.0, %v790
        %792 = vmatprep.mubr.f32.mxu0 0.0
        %793 = vmatmul.mubr.f32.gmra.mrb[0].mxu0 %v379
        %v794 = vpop.f32.mrb[0].mxu0
        %v795 = vadd.f32 0.0, %v794
        %v796 = vpop.f32.mrb[0].mxu0
        %v797 = vadd.f32 0.0, %v796
        %798 = vmatprep.mubr.f32.mxu0 0.0
        %799 = vmatmul.mubr.f32.gmra.mrb[0].mxu0 %v382
        %v800 = vpop.f32.mrb[0].mxu0
        %v801 = vadd.f32 0.0, %v800
        %v802 = vpop.f32.mrb[0].mxu0
        %v803 = vadd.f32 0.0, %v802
        %804 = vdwg.mxu0
        %v805 = vadd.f32 %v708, %v783
        %v806 = vadd.f32 %v709, %v785
        %v807 = vadd.f32 %v710, %v789
        %v808 = vadd.f32 %v711, %v791
        %v809 = vadd.f32 %v712, %v795
        %v810 = vadd.f32 %v713, %v797
        %v811 = vadd.f32 %v714, %v801
        %v812 = vadd.f32 %v715, %v803
        %v813 = vadd.f32 %v805, %v484
        %v814 = vadd.f32 %v806, %v484
        %v815 = vadd.f32 %v807, %v489
        %v816 = vadd.f32 %v808, %v489
        %v817 = vadd.f32 %v809, %v494
        %v818 = vadd.f32 %v810, %v494
        %v819 = vadd.f32 %v811, %v499
        %v820 = vadd.f32 %v812, %v499
        %v821 = vtanh.pop %v813
        %v822 = vtanh.pop %v814
        %v823 = vmul.f32 %v821, 0.5
        %v824 = vmul.f32 %v822, 0.5
        %v825 = vadd.f32 %v823, 0.5
        %v826 = vadd.f32 %v824, 0.5
        %v827 = vtanh.pop %v815
        %v828 = vtanh.pop %v816
        %v829 = vmul.f32 %v827, 0.5
        %v830 = vmul.f32 %v828, 0.5
        %v831 = vadd.f32 %v829, 0.5
        %v832 = vadd.f32 %v830, 0.5
        %v833 = vtanh.pop %v817
        %v834 = vtanh.pop %v818
        %v835 = vtanh.pop %v819
        %v836 = vtanh.pop %v820
        %v837 = vmul.f32 %v835, 0.5
        %v838 = vmul.f32 %v836, 0.5
        %v839 = vadd.f32 %v837, 0.5
        %v840 = vadd.f32 %v838, 0.5
        %v841 = vmul.f32 %v831, %v689
        %v842 = vmul.f32 %v832, %v690
        %v843 = vmul.f32 %v825, %v833
        %v844 = vmul.f32 %v826, %v834
        %v845 = vadd.f32 %v841, %v843
        %v846 = vadd.f32 %v842, %v844
        %v847 = vtanh.pop %v845
        %v848 = vtanh.pop %v846
        %v849 = vmul.f32 %v839, %v847
        %v850 = vmul.f32 %v840, %v848
        %s851 = scalar_lea.vmem %s306, 3
        %v852 = vld [vmem:[%s851] ss:$8 sm:$0x3]
        %v854 = vlaneseq
        %v855 = vshrl.u32 %v854, 7
        %v856 = vsub.s32 0, %v855
        %v857 = vrot.slane %v852, %v856
        %v858 = vlaneseq
        %v859 = vshrl.u32 %v858, 7
        %v860 = vsub.s32 1, %v859
        %v861 = vrot.slane %v852, %v860
        %v864 = vmul.f32 %v335, %v857
        %v865 = vmul.f32 %v335, %v861
        %v866 = vmul.f32 %v340, %v857
        %v867 = vmul.f32 %v340, %v861
        %v868 = vmul.f32 %v345, %v857
        %v869 = vmul.f32 %v345, %v861
        %v870 = vmul.f32 %v350, %v857
        %v871 = vmul.f32 %v350, %v861
        %872 = vmatprep.subr.mxu0 %v850
        %873 = vmatpush1.msra.mxu0 %v849
        %874 = vmatprep.subr.mxu0 0.0
        %875 = vmatpush1.msra.mxu0 0.0
        %876 = vmatprep.subr.mxu0 0.0
        %877 = vmatpush1.msra.mxu0 0.0
        %878 = vmatprep.subr.mxu0 0.0
        %879 = vmatpush1.msra.mxu0 0.0
        %880 = vmatprep.subr.mxu0 0.0
        %881 = vmatpush1.msra.mxu0 0.0
        %882 = vmatprep.subr.mxu0 0.0
        %883 = vmatpush1.msra.mxu0 0.0
        %884 = vmatprep.subr.mxu0 0.0
        %885 = vmatpush1.msra.mxu0 0.0
        %886 = vmatprep.subr.mxu0 0.0
        %887 = vmatpush1.msra.mxu0 0.0
        %888 = vmatprep.subr.mxu0 0.0
        %889 = vmatpush1.msra.mxu0 0.0
        %890 = vmatprep.subr.mxu0 0.0
        %891 = vmatpush1.msra.mxu0 0.0
        %892 = vmatprep.subr.mxu0 0.0
        %893 = vmatpush1.msra.mxu0 0.0
        %894 = vmatprep.subr.mxu0 0.0
        %895 = vmatpush1.msra.mxu0 0.0
        %896 = vmatprep.subr.mxu0 0.0
        %897 = vmatpush1.msra.mxu0 0.0
        %898 = vmatprep.subr.mxu0 0.0
        %899 = vmatpush1.msra.mxu0 0.0
        %900 = vmatprep.subr.mxu0 0.0
        %901 = vmatpush1.msra.mxu0 0.0
        %902 = vmatprep.subr.mxu0 0.0
        %903 = vmatpush1.msra.mxu0 0.0
        %904 = vmatprep.subr.mxu0 0.0
        %905 = vmatpush1.msra.mxu0 0.0
        %906 = vmatprep.subr.mxu0 0.0
        %907 = vmatpush1.msra.mxu0 0.0
        %908 = vmatprep.subr.mxu0 0.0
        %909 = vmatpush1.msra.mxu0 0.0
        %910 = vmatprep.subr.mxu0 0.0
        %911 = vmatpush1.msra.mxu0 0.0
        %912 = vmatprep.subr.mxu0 0.0
        %913 = vmatpush1.msra.mxu0 0.0
        %914 = vmatprep.subr.mxu0 0.0
        %915 = vmatpush1.msra.mxu0 0.0
        %916 = vmatprep.subr.mxu0 0.0
        %917 = vmatpush1.msra.mxu0 0.0
        %918 = vmatprep.subr.mxu0 0.0
        %919 = vmatpush1.msra.mxu0 0.0
        %920 = vmatprep.subr.mxu0 0.0
        %921 = vmatpush1.msra.mxu0 0.0
        %922 = vmatprep.subr.mxu0 0.0
        %923 = vmatpush1.msra.mxu0 0.0
        %924 = vmatprep.subr.mxu0 0.0
        %925 = vmatpush1.msra.mxu0 0.0
        %926 = vmatprep.subr.mxu0 0.0
        %927 = vmatpush1.msra.mxu0 0.0
        %928 = vmatprep.subr.mxu0 0.0
        %929 = vmatpush1.msra.mxu0 0.0
        %930 = vmatprep.subr.mxu0 0.0
        %931 = vmatpush1.msra.mxu0 0.0
        %932 = vmatprep.subr.mxu0 0.0
        %933 = vmatpush1.msra.mxu0 0.0
        %934 = vmatprep.subr.mxu0 0.0
        %935 = vmatpush1.msra.mxu0 0.0
        %936 = vmatprep.mubr.f32.mxu0 0.0
        %937 = vmatmul.mubr.f32.gmra.mrb[0].mxu0 %v373
        %v938 = vpop.f32.mrb[0].mxu0
        %v939 = vadd.f32 0.0, %v938
        %v940 = vpop.f32.mrb[0].mxu0
        %v941 = vadd.f32 0.0, %v940
        %942 = vmatprep.mubr.f32.mxu0 0.0
        %943 = vmatmul.mubr.f32.gmra.mrb[0].mxu0 %v376
        %v944 = vpop.f32.mrb[0].mxu0
        %v945 = vadd.f32 0.0, %v944
        %v946 = vpop.f32.mrb[0].mxu0
        %v947 = vadd.f32 0.0, %v946
        %948 = vmatprep.mubr.f32.mxu0 0.0
        %949 = vmatmul.mubr.f32.gmra.mrb[0].mxu0 %v379
        %v950 = vpop.f32.mrb[0].mxu0
        %v951 = vadd.f32 0.0, %v950
        %v952 = vpop.f32.mrb[0].mxu0
        %v953 = vadd.f32 0.0, %v952
        %954 = vmatprep.mubr.f32.mxu0 0.0
        %955 = vmatmul.mubr.f32.gmra.mrb[0].mxu0 %v382
        %v956 = vpop.f32.mrb[0].mxu0
        %v957 = vadd.f32 0.0, %v956
        %v958 = vpop.f32.mrb[0].mxu0
        %v959 = vadd.f32 0.0, %v958
        %960 = vdwg.mxu0
        %v961 = vadd.f32 %v864, %v939
        %v962 = vadd.f32 %v865, %v941
        %v963 = vadd.f32 %v866, %v945
        %v964 = vadd.f32 %v867, %v947
        %v965 = vadd.f32 %v868, %v951
        %v966 = vadd.f32 %v869, %v953
        %v967 = vadd.f32 %v870, %v957
        %v968 = vadd.f32 %v871, %v959
        %v969 = vadd.f32 %v961, %v484
        %v970 = vadd.f32 %v962, %v484
        %v971 = vadd.f32 %v963, %v489
        %v972 = vadd.f32 %v964, %v489
        %v973 = vadd.f32 %v965, %v494
        %v974 = vadd.f32 %v966, %v494
        %v975 = vadd.f32 %v967, %v499
        %v976 = vadd.f32 %v968, %v499
        %v977 = vtanh.pop %v969
        %v978 = vtanh.pop %v970
        %v979 = vmul.f32 %v977, 0.5
        %v980 = vmul.f32 %v978, 0.5
        %v981 = vadd.f32 %v979, 0.5
        %v982 = vadd.f32 %v980, 0.5
        %v983 = vtanh.pop %v971
        %v984 = vtanh.pop %v972
        %v985 = vmul.f32 %v983, 0.5
        %v986 = vmul.f32 %v984, 0.5
        %v987 = vadd.f32 %v985, 0.5
        %v988 = vadd.f32 %v986, 0.5
        %v989 = vtanh.pop %v973
        %v990 = vtanh.pop %v974
        %v991 = vtanh.pop %v975
        %v992 = vtanh.pop %v976
        %v993 = vmul.f32 %v991, 0.5
        %v994 = vmul.f32 %v992, 0.5
        %v995 = vadd.f32 %v993, 0.5
        %v996 = vadd.f32 %v994, 0.5
        %v997 = vmul.f32 %v987, %v845
        %v998 = vmul.f32 %v988, %v846
        %v999 = vmul.f32 %v981, %v989
        %v1000 = vmul.f32 %v982, %v990
        %v1001 = vadd.f32 %v997, %v999
        %v1002 = vadd.f32 %v998, %v1000
        %v1003 = vtanh.pop %v1001
        %v1004 = vtanh.pop %v1002
        %v1005 = vmul.f32 %v995, %v1003
        %v1006 = vmul.f32 %v996, %v1004
        %s1007 = scalar_lea.vmem %s306, 4
        %v1008 = vld [vmem:[%s1007] ss:$8 sm:$0x3]
        %v1010 = vlaneseq
        %v1011 = vshrl.u32 %v1010, 7
        %v1012 = vsub.s32 0, %v1011
        %v1013 = vrot.slane %v1008, %v1012
        %v1014 = vlaneseq
        %v1015 = vshrl.u32 %v1014, 7
        %v1016 = vsub.s32 1, %v1015
        %v1017 = vrot.slane %v1008, %v1016
        %v1020 = vmul.f32 %v335, %v1013
        %v1021 = vmul.f32 %v335, %v1017
        %v1022 = vmul.f32 %v340, %v1013
        %v1023 = vmul.f32 %v340, %v1017
        %v1024 = vmul.f32 %v345, %v1013
        %v1025 = vmul.f32 %v345, %v1017
        %v1026 = vmul.f32 %v350, %v1013
        %v1027 = vmul.f32 %v350, %v1017
        %1028 = vmatprep.subr.mxu0 %v1006
        %1029 = vmatpush1.msra.mxu0 %v1005
        %1030 = vmatprep.subr.mxu0 0.0
        %1031 = vmatpush1.msra.mxu0 0.0
        %1032 = vmatprep.subr.mxu0 0.0
        %1033 = vmatpush1.msra.mxu0 0.0
        %1034 = vmatprep.subr.mxu0 0.0
        %1035 = vmatpush1.msra.mxu0 0.0
        %1036 = vmatprep.subr.mxu0 0.0
        %1037 = vmatpush1.msra.mxu0 0.0
        %1038 = vmatprep.subr.mxu0 0.0
        %1039 = vmatpush1.msra.mxu0 0.0
        %1040 = vmatprep.subr.mxu0 0.0
        %1041 = vmatpush1.msra.mxu0 0.0
        %1042 = vmatprep.subr.mxu0 0.0
        %1043 = vmatpush1.msra.mxu0 0.0
        %1044 = vmatprep.subr.mxu0 0.0
        %1045 = vmatpush1.msra.mxu0 0.0
        %1046 = vmatprep.subr.mxu0 0.0
        %1047 = vmatpush1.msra.mxu0 0.0
        %1048 = vmatprep.subr.mxu0 0.0
        %1049 = vmatpush1.msra.mxu0 0.0
        %1050 = vmatprep.subr.mxu0 0.0
        %1051 = vmatpush1.msra.mxu0 0.0
        %1052 = vmatprep.subr.mxu0 0.0
        %1053 = vmatpush1.msra.mxu0 0.0
        %1054 = vmatprep.subr.mxu0 0.0
        %1055 = vmatpush1.msra.mxu0 0.0
        %1056 = vmatprep.subr.mxu0 0.0
        %1057 = vmatpush1.msra.mxu0 0.0
        %1058 = vmatprep.subr.mxu0 0.0
        %1059 = vmatpush1.msra.mxu0 0.0
        %1060 = vmatprep.subr.mxu0 0.0
        %1061 = vmatpush1.msra.mxu0 0.0
        %1062 = vmatprep.subr.mxu0 0.0
        %1063 = vmatpush1.msra.mxu0 0.0
        %1064 = vmatprep.subr.mxu0 0.0
        %1065 = vmatpush1.msra.mxu0 0.0
        %1066 = vmatprep.subr.mxu0 0.0
        %1067 = vmatpush1.msra.mxu0 0.0
        %1068 = vmatprep.subr.mxu0 0.0
        %1069 = vmatpush1.msra.mxu0 0.0
        %1070 = vmatprep.subr.mxu0 0.0
        %1071 = vmatpush1.msra.mxu0 0.0
        %1072 = vmatprep.subr.mxu0 0.0
        %1073 = vmatpush1.msra.mxu0 0.0
        %1074 = vmatprep.subr.mxu0 0.0
        %1075 = vmatpush1.msra.mxu0 0.0
        %1076 = vmatprep.subr.mxu0 0.0
        %1077 = vmatpush1.msra.mxu0 0.0
        %1078 = vmatprep.subr.mxu0 0.0
        %1079 = vmatpush1.msra.mxu0 0.0
        %1080 = vmatprep.subr.mxu0 0.0
        %1081 = vmatpush1.msra.mxu0 0.0
        %1082 = vmatprep.subr.mxu0 0.0
        %1083 = vmatpush1.msra.mxu0 0.0
        %1084 = vmatprep.subr.mxu0 0.0
        %1085 = vmatpush1.msra.mxu0 0.0
        %1086 = vmatprep.subr.mxu0 0.0
        %1087 = vmatpush1.msra.mxu0 0.0
        %1088 = vmatprep.subr.mxu0 0.0
        %1089 = vmatpush1.msra.mxu0 0.0
        %1090 = vmatprep.subr.mxu0 0.0
        %1091 = vmatpush1.msra.mxu0 0.0
        %1092 = vmatprep.mubr.f32.mxu0 0.0
        %1093 = vmatmul.mubr.f32.gmra.mrb[0].mxu0 %v373
        %v1094 = vpop.f32.mrb[0].mxu0
        %v1095 = vadd.f32 0.0, %v1094
        %v1096 = vpop.f32.mrb[0].mxu0
        %v1097 = vadd.f32 0.0, %v1096
        %1098 = vmatprep.mubr.f32.mxu0 0.0
        %1099 = vmatmul.mubr.f32.gmra.mrb[0].mxu0 %v376
        %v1100 = vpop.f32.mrb[0].mxu0
        %v1101 = vadd.f32 0.0, %v1100
        %v1102 = vpop.f32.mrb[0].mxu0
        %v1103 = vadd.f32 0.0, %v1102
        %1104 = vmatprep.mubr.f32.mxu0 0.0
        %1105 = vmatmul.mubr.f32.gmra.mrb[0].mxu0 %v379
        %v1106 = vpop.f32.mrb[0].mxu0
        %v1107 = vadd.f32 0.0, %v1106
        %v1108 = vpop.f32.mrb[0].mxu0
        %v1109 = vadd.f32 0.0, %v1108
        %1110 = vmatprep.mubr.f32.mxu0 0.0
        %1111 = vmatmul.mubr.f32.gmra.mrb[0].mxu0 %v382
        %v1112 = vpop.f32.mrb[0].mxu0
        %v1113 = vadd.f32 0.0, %v1112
        %v1114 = vpop.f32.mrb[0].mxu0
        %v1115 = vadd.f32 0.0, %v1114
        %1116 = vdwg.mxu0
        %v1117 = vadd.f32 %v1020, %v1095
        %v1118 = vadd.f32 %v1021, %v1097
        %v1119 = vadd.f32 %v1022, %v1101
        %v1120 = vadd.f32 %v1023, %v1103
        %v1121 = vadd.f32 %v1024, %v1107
        %v1122 = vadd.f32 %v1025, %v1109
        %v1123 = vadd.f32 %v1026, %v1113
        %v1124 = vadd.f32 %v1027, %v1115
        %v1125 = vadd.f32 %v1117, %v484
        %v1126 = vadd.f32 %v1118, %v484
        %v1127 = vadd.f32 %v1119, %v489
        %v1128 = vadd.f32 %v1120, %v489
        %v1129 = vadd.f32 %v1121, %v494
        %v1130 = vadd.f32 %v1122, %v494
        %v1131 = vadd.f32 %v1123, %v499
        %v1132 = vadd.f32 %v1124, %v499
        %v1133 = vtanh.pop %v1125
        %v1134 = vtanh.pop %v1126
        %v1135 = vmul.f32 %v1133, 0.5
        %v1136 = vmul.f32 %v1134, 0.5
        %v1137 = vadd.f32 %v1135, 0.5
        %v1138 = vadd.f32 %v1136, 0.5
        %v1139 = vtanh.pop %v1127
        %v1140 = vtanh.pop %v1128
        %v1141 = vmul.f32 %v1139, 0.5
        %v1142 = vmul.f32 %v1140, 0.5
        %v1143 = vadd.f32 %v1141, 0.5
        %v1144 = vadd.f32 %v1142, 0.5
        %v1145 = vtanh.pop %v1129
        %v1146 = vtanh.pop %v1130
        %v1147 = vtanh.pop %v1131
        %v1148 = vtanh.pop %v1132
        %v1149 = vmul.f32 %v1147, 0.5
        %v1150 = vmul.f32 %v1148, 0.5
        %v1151 = vadd.f32 %v1149, 0.5
        %v1152 = vadd.f32 %v1150, 0.5
        %v1153 = vmul.f32 %v1143, %v1001
        %v1154 = vmul.f32 %v1144, %v1002
        %v1155 = vmul.f32 %v1137, %v1145
        %v1156 = vmul.f32 %v1138, %v1146
        %v1157 = vadd.f32 %v1153, %v1155
        %v1158 = vadd.f32 %v1154, %v1156
        %v1159 = vtanh.pop %v1157
        %v1160 = vtanh.pop %v1158
        %v1161 = vmul.f32 %v1151, %v1159
        %v1162 = vmul.f32 %v1152, %v1160
        %s1163 = scalar_lea.vmem %s306, 5
        %v1164 = vld [vmem:[%s1163] ss:$8 sm:$0x3]
        %v1166 = vlaneseq
        %v1167 = vshrl.u32 %v1166, 7
        %v1168 = vsub.s32 0, %v1167
        %v1169 = vrot.slane %v1164, %v1168
        %v1170 = vlaneseq
        %v1171 = vshrl.u32 %v1170, 7
        %v1172 = vsub.s32 1, %v1171
        %v1173 = vrot.slane %v1164, %v1172
        %v1176 = vmul.f32 %v335, %v1169
        %v1177 = vmul.f32 %v335, %v1173
        %v1178 = vmul.f32 %v340, %v1169
        %v1179 = vmul.f32 %v340, %v1173
        %v1180 = vmul.f32 %v345, %v1169
        %v1181 = vmul.f32 %v345, %v1173
        %v1182 = vmul.f32 %v350, %v1169
        %v1183 = vmul.f32 %v350, %v1173
        %1184 = vmatprep.subr.mxu0 %v1162
        %1185 = vmatpush1.msra.mxu0 %v1161
        %1186 = vmatprep.subr.mxu0 0.0
        %1187 = vmatpush1.msra.mxu0 0.0
        %1188 = vmatprep.subr.mxu0 0.0
        %1189 = vmatpush1.msra.mxu0 0.0
        %1190 = vmatprep.subr.mxu0 0.0
        %1191 = vmatpush1.msra.mxu0 0.0
        %1192 = vmatprep.subr.mxu0 0.0
        %1193 = vmatpush1.msra.mxu0 0.0
        %1194 = vmatprep.subr.mxu0 0.0
        %1195 = vmatpush1.msra.mxu0 0.0
        %1196 = vmatprep.subr.mxu0 0.0
        %1197 = vmatpush1.msra.mxu0 0.0
        %1198 = vmatprep.subr.mxu0 0.0
        %1199 = vmatpush1.msra.mxu0 0.0
        %1200 = vmatprep.subr.mxu0 0.0
        %1201 = vmatpush1.msra.mxu0 0.0
        %1202 = vmatprep.subr.mxu0 0.0
        %1203 = vmatpush1.msra.mxu0 0.0
        %1204 = vmatprep.subr.mxu0 0.0
        %1205 = vmatpush1.msra.mxu0 0.0
        %1206 = vmatprep.subr.mxu0 0.0
        %1207 = vmatpush1.msra.mxu0 0.0
        %1208 = vmatprep.subr.mxu0 0.0
        %1209 = vmatpush1.msra.mxu0 0.0
        %1210 = vmatprep.subr.mxu0 0.0
        %1211 = vmatpush1.msra.mxu0 0.0
        %1212 = vmatprep.subr.mxu0 0.0
        %1213 = vmatpush1.msra.mxu0 0.0
        %1214 = vmatprep.subr.mxu0 0.0
        %1215 = vmatpush1.msra.mxu0 0.0
        %1216 = vmatprep.subr.mxu0 0.0
        %1217 = vmatpush1.msra.mxu0 0.0
        %1218 = vmatprep.subr.mxu0 0.0
        %1219 = vmatpush1.msra.mxu0 0.0
        %1220 = vmatprep.subr.mxu0 0.0
        %1221 = vmatpush1.msra.mxu0 0.0
        %1222 = vmatprep.subr.mxu0 0.0
        %1223 = vmatpush1.msra.mxu0 0.0
        %1224 = vmatprep.subr.mxu0 0.0
        %1225 = vmatpush1.msra.mxu0 0.0
        %1226 = vmatprep.subr.mxu0 0.0
        %1227 = vmatpush1.msra.mxu0 0.0
        %1228 = vmatprep.subr.mxu0 0.0
        %1229 = vmatpush1.msra.mxu0 0.0
        %1230 = vmatprep.subr.mxu0 0.0
        %1231 = vmatpush1.msra.mxu0 0.0
        %1232 = vmatprep.subr.mxu0 0.0
        %1233 = vmatpush1.msra.mxu0 0.0
        %1234 = vmatprep.subr.mxu0 0.0
        %1235 = vmatpush1.msra.mxu0 0.0
        %1236 = vmatprep.subr.mxu0 0.0
        %1237 = vmatpush1.msra.mxu0 0.0
        %1238 = vmatprep.subr.mxu0 0.0
        %1239 = vmatpush1.msra.mxu0 0.0
        %1240 = vmatprep.subr.mxu0 0.0
        %1241 = vmatpush1.msra.mxu0 0.0
        %1242 = vmatprep.subr.mxu0 0.0
        %1243 = vmatpush1.msra.mxu0 0.0
        %1244 = vmatprep.subr.mxu0 0.0
        %1245 = vmatpush1.msra.mxu0 0.0
        %1246 = vmatprep.subr.mxu0 0.0
        %1247 = vmatpush1.msra.mxu0 0.0
        %1248 = vmatprep.mubr.f32.mxu0 0.0
        %1249 = vmatmul.mubr.f32.gmra.mrb[0].mxu0 %v373
        %v1250 = vpop.f32.mrb[0].mxu0
        %v1251 = vadd.f32 0.0, %v1250
        %v1252 = vpop.f32.mrb[0].mxu0
        %v1253 = vadd.f32 0.0, %v1252
        %1254 = vmatprep.mubr.f32.mxu0 0.0
        %1255 = vmatmul.mubr.f32.gmra.mrb[0].mxu0 %v376
        %v1256 = vpop.f32.mrb[0].mxu0
        %v1257 = vadd.f32 0.0, %v1256
        %v1258 = vpop.f32.mrb[0].mxu0
        %v1259 = vadd.f32 0.0, %v1258
        %1260 = vmatprep.mubr.f32.mxu0 0.0
        %1261 = vmatmul.mubr.f32.gmra.mrb[0].mxu0 %v379
        %v1262 = vpop.f32.mrb[0].mxu0
        %v1263 = vadd.f32 0.0, %v1262
        %v1264 = vpop.f32.mrb[0].mxu0
        %v1265 = vadd.f32 0.0, %v1264
        %1266 = vmatprep.mubr.f32.mxu0 0.0
        %1267 = vmatmul.mubr.f32.gmra.mrb[0].mxu0 %v382
        %v1268 = vpop.f32.mrb[0].mxu0
        %v1269 = vadd.f32 0.0, %v1268
        %v1270 = vpop.f32.mrb[0].mxu0
        %v1271 = vadd.f32 0.0, %v1270
        %1272 = vdwg.mxu0
        %v1273 = vadd.f32 %v1176, %v1251
        %v1274 = vadd.f32 %v1177, %v1253
        %v1275 = vadd.f32 %v1178, %v1257
        %v1276 = vadd.f32 %v1179, %v1259
        %v1277 = vadd.f32 %v1180, %v1263
        %v1278 = vadd.f32 %v1181, %v1265
        %v1279 = vadd.f32 %v1182, %v1269
        %v1280 = vadd.f32 %v1183, %v1271
        %v1281 = vadd.f32 %v1273, %v484
        %v1282 = vadd.f32 %v1274, %v484
        %v1283 = vadd.f32 %v1275, %v489
        %v1284 = vadd.f32 %v1276, %v489
        %v1285 = vadd.f32 %v1277, %v494
        %v1286 = vadd.f32 %v1278, %v494
        %v1287 = vadd.f32 %v1279, %v499
        %v1288 = vadd.f32 %v1280, %v499
        %v1289 = vtanh.pop %v1281
        %v1290 = vtanh.pop %v1282
        %v1291 = vmul.f32 %v1289, 0.5
        %v1292 = vmul.f32 %v1290, 0.5
        %v1293 = vadd.f32 %v1291, 0.5
        %v1294 = vadd.f32 %v1292, 0.5
        %v1295 = vtanh.pop %v1283
        %v1296 = vtanh.pop %v1284
        %v1297 = vmul.f32 %v1295, 0.5
        %v1298 = vmul.f32 %v1296, 0.5
        %v1299 = vadd.f32 %v1297, 0.5
        %v1300 = vadd.f32 %v1298, 0.5
        %v1301 = vtanh.pop %v1285
        %v1302 = vtanh.pop %v1286
        %v1303 = vtanh.pop %v1287
        %v1304 = vtanh.pop %v1288
        %v1305 = vmul.f32 %v1303, 0.5
        %v1306 = vmul.f32 %v1304, 0.5
        %v1307 = vadd.f32 %v1305, 0.5
        %v1308 = vadd.f32 %v1306, 0.5
        %v1309 = vmul.f32 %v1299, %v1157
        %v1310 = vmul.f32 %v1300, %v1158
        %v1311 = vmul.f32 %v1293, %v1301
        %v1312 = vmul.f32 %v1294, %v1302
        %v1313 = vadd.f32 %v1309, %v1311
        %v1314 = vadd.f32 %v1310, %v1312
        %v1315 = vtanh.pop %v1313
        %v1316 = vtanh.pop %v1314
        %v1317 = vmul.f32 %v1307, %v1315
        %v1318 = vmul.f32 %v1308, %v1316
        %1320 = vset.pattern.permute.xlu0 0
        %1321 = vperm.xlu0 %1320, %v325
        %v1322 = vpop.permute.xlu0 %1321
        %1325 = vset.pattern.permute.xlu0 0
        %1326 = vperm.xlu0 %1325, %v326
        %v1327 = vpop.permute.xlu0 %1326
        %1330 = vset.pattern.permute.xlu0 0
        %1331 = vperm.xlu0 %1330, %v327
        %v1332 = vpop.permute.xlu0 %1331
        %1335 = vset.pattern.permute.xlu0 0
        %1336 = vperm.xlu0 %1335, %v328
        %v1337 = vpop.permute.xlu0 %1336
        %v1340 = vsel %vm371, %v321, 0
        %v1343 = vsel %vm371, %v322, 0
        %v1346 = vsel %vm371, %v323, 0
        %v1349 = vsel %vm371, %v324, 0
        %1351 = vmatprep.subr.mxu0 %v1318
        %1352 = vmatpush1.msra.mxu0 %v1317
        %1353 = vmatprep.subr.mxu0 0.0
        %1354 = vmatpush1.msra.mxu0 0.0
        %1355 = vmatprep.subr.mxu0 0.0
        %1356 = vmatpush1.msra.mxu0 0.0
        %1357 = vmatprep.subr.mxu0 0.0
        %1358 = vmatpush1.msra.mxu0 0.0
        %1359 = vmatprep.subr.mxu0 0.0
        %1360 = vmatpush1.msra.mxu0 0.0
        %1361 = vmatprep.subr.mxu0 0.0
        %1362 = vmatpush1.msra.mxu0 0.0
        %1363 = vmatprep.subr.mxu0 0.0
        %1364 = vmatpush1.msra.mxu0 0.0
        %1365 = vmatprep.subr.mxu0 0.0
        %1366 = vmatpush1.msra.mxu0 0.0
        %1367 = vmatprep.subr.mxu0 0.0
        %1368 = vmatpush1.msra.mxu0 0.0
        %1369 = vmatprep.subr.mxu0 0.0
        %1370 = vmatpush1.msra.mxu0 0.0
        %1371 = vmatprep.subr.mxu0 0.0
        %1372 = vmatpush1.msra.mxu0 0.0
        %1373 = vmatprep.subr.mxu0 0.0
        %1374 = vmatpush1.msra.mxu0 0.0
        %1375 = vmatprep.subr.mxu0 0.0
        %1376 = vmatpush1.msra.mxu0 0.0
        %1377 = vmatprep.subr.mxu0 0.0
        %1378 = vmatpush1.msra.mxu0 0.0
        %1379 = vmatprep.subr.mxu0 0.0
        %1380 = vmatpush1.msra.mxu0 0.0
        %1381 = vmatprep.subr.mxu0 0.0
        %1382 = vmatpush1.msra.mxu0 0.0
        %1383 = vmatprep.subr.mxu0 0.0
        %1384 = vmatpush1.msra.mxu0 0.0
        %1385 = vmatprep.subr.mxu0 0.0
        %1386 = vmatpush1.msra.mxu0 0.0
        %1387 = vmatprep.subr.mxu0 0.0
        %1388 = vmatpush1.msra.mxu0 0.0
        %1389 = vmatprep.subr.mxu0 0.0
        %1390 = vmatpush1.msra.mxu0 0.0
        %1391 = vmatprep.subr.mxu0 0.0
        %1392 = vmatpush1.msra.mxu0 0.0
        %1393 = vmatprep.subr.mxu0 0.0
        %1394 = vmatpush1.msra.mxu0 0.0
        %1395 = vmatprep.subr.mxu0 0.0
        %1396 = vmatpush1.msra.mxu0 0.0
        %1397 = vmatprep.subr.mxu0 0.0
        %1398 = vmatpush1.msra.mxu0 0.0
        %1399 = vmatprep.subr.mxu0 0.0
        %1400 = vmatpush1.msra.mxu0 0.0
        %1401 = vmatprep.subr.mxu0 0.0
        %1402 = vmatpush1.msra.mxu0 0.0
        %1403 = vmatprep.subr.mxu0 0.0
        %1404 = vmatpush1.msra.mxu0 0.0
        %1405 = vmatprep.subr.mxu0 0.0
        %1406 = vmatpush1.msra.mxu0 0.0
        %1407 = vmatprep.subr.mxu0 0.0
        %1408 = vmatpush1.msra.mxu0 0.0
        %1409 = vmatprep.subr.mxu0 0.0
        %1410 = vmatpush1.msra.mxu0 0.0
        %1411 = vmatprep.subr.mxu0 0.0
        %1412 = vmatpush1.msra.mxu0 0.0
        %1413 = vmatprep.subr.mxu0 0.0
        %1414 = vmatpush1.msra.mxu0 0.0
        %1415 = vmatprep.mubr.f32.mxu0 0.0
        %1416 = vmatmul.mubr.f32.gmra.mrb[0].mxu0 %v1340
        %v1417 = vpop.f32.mrb[0].mxu0
        %v1418 = vadd.f32 %v1322, %v1417
        %v1419 = vpop.f32.mrb[0].mxu0
        %v1420 = vadd.f32 %v1322, %v1419
        %1421 = vmatprep.mubr.f32.mxu0 0.0
        %1422 = vmatmul.mubr.f32.gmra.mrb[0].mxu0 %v1343
        %v1423 = vpop.f32.mrb[0].mxu0
        %v1424 = vadd.f32 %v1327, %v1423
        %v1425 = vpop.f32.mrb[0].mxu0
        %v1426 = vadd.f32 %v1327, %v1425
        %1427 = vmatprep.mubr.f32.mxu0 0.0
        %1428 = vmatmul.mubr.f32.gmra.mrb[0].mxu0 %v1346
        %v1429 = vpop.f32.mrb[0].mxu0
        %v1430 = vadd.f32 %v1332, %v1429
        %v1431 = vpop.f32.mrb[0].mxu0
        %v1432 = vadd.f32 %v1332, %v1431
        %1433 = vmatprep.mubr.f32.mxu0 0.0
        %1434 = vmatmul.mubr.f32.gmra.mrb[0].mxu0 %v1349
        %v1435 = vpop.f32.mrb[0].mxu0
        %v1436 = vadd.f32 %v1337, %v1435
        %v1437 = vpop.f32.mrb[0].mxu0
        %v1438 = vadd.f32 %v1337, %v1437
        %1439 = vdwg.mxu0
        %v1440 = vtanh.pop %v1418
        %v1441 = vtanh.pop %v1420
        %v1442 = vmul.f32 %v1440, 0.5
        %v1443 = vmul.f32 %v1441, 0.5
        %v1444 = vadd.f32 %v1442, 0.5
        %v1445 = vadd.f32 %v1443, 0.5
        %v1446 = vtanh.pop %v1424
        %v1447 = vtanh.pop %v1426
        %v1448 = vmul.f32 %v1446, 0.5
        %v1449 = vmul.f32 %v1447, 0.5
        %v1450 = vadd.f32 %v1448, 0.5
        %v1451 = vadd.f32 %v1449, 0.5
        %v1452 = vtanh.pop %v1430
        %v1453 = vtanh.pop %v1432
        %v1454 = vtanh.pop %v1436
        %v1455 = vtanh.pop %v1438
        %v1456 = vmul.f32 %v1454, 0.5
        %v1457 = vmul.f32 %v1455, 0.5
        %v1458 = vadd.f32 %v1456, 0.5
        %v1459 = vadd.f32 %v1457, 0.5
        %v1460 = vmul.f32 %v1450, %v1313
        %v1461 = vmul.f32 %v1451, %v1314
        %v1462 = vmul.f32 %v1444, %v1452
        %v1463 = vmul.f32 %v1445, %v1453
        %v1464 = vadd.f32 %v1460, %v1462
        %v1465 = vadd.f32 %v1461, %v1463
        %v1466 = vtanh.pop %v1464
        %v1467 = vtanh.pop %v1465
        %v1468 = vmul.f32 %v1458, %v1466
        %v1469 = vmul.f32 %v1459, %v1467
        %1471 = vset.pattern.permute.xlu0 0
        %1472 = vperm.xlu0 %1471, %v329
        %v1473 = vpop.permute.xlu0 %1472
        %v1475 = vmul.f32 %v1473, %v1468
        %v1476 = vmul.f32 %v1473, %v1469
        %v1477 = vrot.slane %v1475, 4
        %v1478 = vadd.f32 %v1475, %v1477
        %v1479 = vrot.slane %v1478, 2
        %v1480 = vadd.f32 %v1478, %v1479
        %v1481 = vrot.slane %v1480, 1
        %v1482 = vadd.f32 %v1480, %v1481
        %v1483 = vrot.slane %v1476, 4
        %v1484 = vadd.f32 %v1476, %v1483
        %v1485 = vrot.slane %v1484, 2
        %v1486 = vadd.f32 %v1484, %v1485
        %v1487 = vrot.slane %v1486, 1
        %v1488 = vadd.f32 %v1486, %v1487
        %1490 = vset.pattern.permute.xlu0 0
        %1491 = vperm.xlu0 %1490, %v330
        %v1492 = vpop.permute.xlu0 %1491
        %v1494 = vlaneseq
        %v1495 = vshrl.u32 %v1494, 7
        %v1496 = vsub.s32 0, %v1495
        %v1497 = vrot.slane %v1492, %v1496
        %v1498 = vadd.f32 %v1482, %v1497
        %v1499 = vadd.f32 %v1488, %v1497
        %v1500 = vtanh.pop %v1498
        %v1501 = vtanh.pop %v1499
        %v1502 = vmul.f32 %v1500, 0.5
        %v1503 = vmul.f32 %v1501, 0.5
        %v1504 = vadd.f32 %v1502, 0.5
        %v1505 = vadd.f32 %v1503, 0.5
        %1506 = vmatprep.subr.mxu0 %v1469
        %1507 = vmatpush1.msra.mxu0 %v1468
        %1508 = vmatprep.subr.mxu0 0.0
        %1509 = vmatpush1.msra.mxu0 0.0
        %1510 = vmatprep.subr.mxu0 0.0
        %1511 = vmatpush1.msra.mxu0 0.0
        %1512 = vmatprep.subr.mxu0 0.0
        %1513 = vmatpush1.msra.mxu0 0.0
        %1514 = vmatprep.subr.mxu0 0.0
        %1515 = vmatpush1.msra.mxu0 0.0
        %1516 = vmatprep.subr.mxu0 0.0
        %1517 = vmatpush1.msra.mxu0 0.0
        %1518 = vmatprep.subr.mxu0 0.0
        %1519 = vmatpush1.msra.mxu0 0.0
        %1520 = vmatprep.subr.mxu0 0.0
        %1521 = vmatpush1.msra.mxu0 0.0
        %1522 = vmatprep.subr.mxu0 0.0
        %1523 = vmatpush1.msra.mxu0 0.0
        %1524 = vmatprep.subr.mxu0 0.0
        %1525 = vmatpush1.msra.mxu0 0.0
        %1526 = vmatprep.subr.mxu0 0.0
        %1527 = vmatpush1.msra.mxu0 0.0
        %1528 = vmatprep.subr.mxu0 0.0
        %1529 = vmatpush1.msra.mxu0 0.0
        %1530 = vmatprep.subr.mxu0 0.0
        %1531 = vmatpush1.msra.mxu0 0.0
        %1532 = vmatprep.subr.mxu0 0.0
        %1533 = vmatpush1.msra.mxu0 0.0
        %1534 = vmatprep.subr.mxu0 0.0
        %1535 = vmatpush1.msra.mxu0 0.0
        %1536 = vmatprep.subr.mxu0 0.0
        %1537 = vmatpush1.msra.mxu0 0.0
        %1538 = vmatprep.subr.mxu0 0.0
        %1539 = vmatpush1.msra.mxu0 0.0
        %1540 = vmatprep.subr.mxu0 0.0
        %1541 = vmatpush1.msra.mxu0 0.0
        %1542 = vmatprep.subr.mxu0 0.0
        %1543 = vmatpush1.msra.mxu0 0.0
        %1544 = vmatprep.subr.mxu0 0.0
        %1545 = vmatpush1.msra.mxu0 0.0
        %1546 = vmatprep.subr.mxu0 0.0
        %1547 = vmatpush1.msra.mxu0 0.0
        %1548 = vmatprep.subr.mxu0 0.0
        %1549 = vmatpush1.msra.mxu0 0.0
        %1550 = vmatprep.subr.mxu0 0.0
        %1551 = vmatpush1.msra.mxu0 0.0
        %1552 = vmatprep.subr.mxu0 0.0
        %1553 = vmatpush1.msra.mxu0 0.0
        %1554 = vmatprep.subr.mxu0 0.0
        %1555 = vmatpush1.msra.mxu0 0.0
        %1556 = vmatprep.subr.mxu0 0.0
        %1557 = vmatpush1.msra.mxu0 0.0
        %1558 = vmatprep.subr.mxu0 0.0
        %1559 = vmatpush1.msra.mxu0 0.0
        %1560 = vmatprep.subr.mxu0 0.0
        %1561 = vmatpush1.msra.mxu0 0.0
        %1562 = vmatprep.subr.mxu0 0.0
        %1563 = vmatpush1.msra.mxu0 0.0
        %1564 = vmatprep.subr.mxu0 0.0
        %1565 = vmatpush1.msra.mxu0 0.0
        %1566 = vmatprep.subr.mxu0 0.0
        %1567 = vmatpush1.msra.mxu0 0.0
        %1568 = vmatprep.subr.mxu0 0.0
        %1569 = vmatpush1.msra.mxu0 0.0
        %1570 = vmatprep.mubr.f32.mxu0 0.0
        %1571 = vmatmul.mubr.f32.gmra.mrb[0].mxu0 %v1340
        %v1572 = vpop.f32.mrb[0].mxu0
        %v1573 = vadd.f32 %v1322, %v1572
        %v1574 = vpop.f32.mrb[0].mxu0
        %v1575 = vadd.f32 %v1322, %v1574
        %1576 = vmatprep.mubr.f32.mxu0 0.0
        %1577 = vmatmul.mubr.f32.gmra.mrb[0].mxu0 %v1343
        %v1578 = vpop.f32.mrb[0].mxu0
        %v1579 = vadd.f32 %v1327, %v1578
        %v1580 = vpop.f32.mrb[0].mxu0
        %v1581 = vadd.f32 %v1327, %v1580
        %1582 = vmatprep.mubr.f32.mxu0 0.0
        %1583 = vmatmul.mubr.f32.gmra.mrb[0].mxu0 %v1346
        %v1584 = vpop.f32.mrb[0].mxu0
        %v1585 = vadd.f32 %v1332, %v1584
        %v1586 = vpop.f32.mrb[0].mxu0
        %v1587 = vadd.f32 %v1332, %v1586
        %1588 = vmatprep.mubr.f32.mxu0 0.0
        %1589 = vmatmul.mubr.f32.gmra.mrb[0].mxu0 %v1349
        %v1590 = vpop.f32.mrb[0].mxu0
        %v1591 = vadd.f32 %v1337, %v1590
        %v1592 = vpop.f32.mrb[0].mxu0
        %v1593 = vadd.f32 %v1337, %v1592
        %1594 = vdwg.mxu0
        %v1595 = vtanh.pop %v1573
        %v1596 = vtanh.pop %v1575
        %v1597 = vmul.f32 %v1595, 0.5
        %v1598 = vmul.f32 %v1596, 0.5
        %v1599 = vadd.f32 %v1597, 0.5
        %v1600 = vadd.f32 %v1598, 0.5
        %v1601 = vtanh.pop %v1579
        %v1602 = vtanh.pop %v1581
        %v1603 = vmul.f32 %v1601, 0.5
        %v1604 = vmul.f32 %v1602, 0.5
        %v1605 = vadd.f32 %v1603, 0.5
        %v1606 = vadd.f32 %v1604, 0.5
        %v1607 = vtanh.pop %v1585
        %v1608 = vtanh.pop %v1587
        %v1609 = vtanh.pop %v1591
        %v1610 = vtanh.pop %v1593
        %v1611 = vmul.f32 %v1609, 0.5
        %v1612 = vmul.f32 %v1610, 0.5
        %v1613 = vadd.f32 %v1611, 0.5
        %v1614 = vadd.f32 %v1612, 0.5
        %v1615 = vmul.f32 %v1605, %v1464
        %v1616 = vmul.f32 %v1606, %v1465
        %v1617 = vmul.f32 %v1599, %v1607
        %v1618 = vmul.f32 %v1600, %v1608
        %v1619 = vadd.f32 %v1615, %v1617
        %v1620 = vadd.f32 %v1616, %v1618
        %v1621 = vtanh.pop %v1619
        %v1622 = vtanh.pop %v1620
        %v1623 = vmul.f32 %v1613, %v1621
        %v1624 = vmul.f32 %v1614, %v1622
        %v1625 = vmul.f32 %v1473, %v1623
        %v1626 = vmul.f32 %v1473, %v1624
        %v1627 = vrot.slane %v1625, 4
        %v1628 = vadd.f32 %v1625, %v1627
        %v1629 = vrot.slane %v1628, 2
        %v1630 = vadd.f32 %v1628, %v1629
        %v1631 = vrot.slane %v1630, 1
        %v1632 = vadd.f32 %v1630, %v1631
        %v1633 = vrot.slane %v1626, 4
        %v1634 = vadd.f32 %v1626, %v1633
        %v1635 = vrot.slane %v1634, 2
        %v1636 = vadd.f32 %v1634, %v1635
        %v1637 = vrot.slane %v1636, 1
        %v1638 = vadd.f32 %v1636, %v1637
        %v1639 = vadd.f32 %v1632, %v1497
        %v1640 = vadd.f32 %v1638, %v1497
        %v1641 = vtanh.pop %v1639
        %v1642 = vtanh.pop %v1640
        %v1643 = vmul.f32 %v1641, 0.5
        %v1644 = vmul.f32 %v1642, 0.5
        %v1645 = vadd.f32 %v1643, 0.5
        %v1646 = vadd.f32 %v1644, 0.5
        %1647 = vmatprep.subr.mxu0 %v1624
        %1648 = vmatpush1.msra.mxu0 %v1623
        %1649 = vmatprep.subr.mxu0 0.0
        %1650 = vmatpush1.msra.mxu0 0.0
        %1651 = vmatprep.subr.mxu0 0.0
        %1652 = vmatpush1.msra.mxu0 0.0
        %1653 = vmatprep.subr.mxu0 0.0
        %1654 = vmatpush1.msra.mxu0 0.0
        %1655 = vmatprep.subr.mxu0 0.0
        %1656 = vmatpush1.msra.mxu0 0.0
        %1657 = vmatprep.subr.mxu0 0.0
        %1658 = vmatpush1.msra.mxu0 0.0
        %1659 = vmatprep.subr.mxu0 0.0
        %1660 = vmatpush1.msra.mxu0 0.0
        %1661 = vmatprep.subr.mxu0 0.0
        %1662 = vmatpush1.msra.mxu0 0.0
        %1663 = vmatprep.subr.mxu0 0.0
        %1664 = vmatpush1.msra.mxu0 0.0
        %1665 = vmatprep.subr.mxu0 0.0
        %1666 = vmatpush1.msra.mxu0 0.0
        %1667 = vmatprep.subr.mxu0 0.0
        %1668 = vmatpush1.msra.mxu0 0.0
        %1669 = vmatprep.subr.mxu0 0.0
        %1670 = vmatpush1.msra.mxu0 0.0
        %1671 = vmatprep.subr.mxu0 0.0
        %1672 = vmatpush1.msra.mxu0 0.0
        %1673 = vmatprep.subr.mxu0 0.0
        %1674 = vmatpush1.msra.mxu0 0.0
        %1675 = vmatprep.subr.mxu0 0.0
        %1676 = vmatpush1.msra.mxu0 0.0
        %1677 = vmatprep.subr.mxu0 0.0
        %1678 = vmatpush1.msra.mxu0 0.0
        %1679 = vmatprep.subr.mxu0 0.0
        %1680 = vmatpush1.msra.mxu0 0.0
        %1681 = vmatprep.subr.mxu0 0.0
        %1682 = vmatpush1.msra.mxu0 0.0
        %1683 = vmatprep.subr.mxu0 0.0
        %1684 = vmatpush1.msra.mxu0 0.0
        %1685 = vmatprep.subr.mxu0 0.0
        %1686 = vmatpush1.msra.mxu0 0.0
        %1687 = vmatprep.subr.mxu0 0.0
        %1688 = vmatpush1.msra.mxu0 0.0
        %1689 = vmatprep.subr.mxu0 0.0
        %1690 = vmatpush1.msra.mxu0 0.0
        %1691 = vmatprep.subr.mxu0 0.0
        %1692 = vmatpush1.msra.mxu0 0.0
        %1693 = vmatprep.subr.mxu0 0.0
        %1694 = vmatpush1.msra.mxu0 0.0
        %1695 = vmatprep.subr.mxu0 0.0
        %1696 = vmatpush1.msra.mxu0 0.0
        %1697 = vmatprep.subr.mxu0 0.0
        %1698 = vmatpush1.msra.mxu0 0.0
        %1699 = vmatprep.subr.mxu0 0.0
        %1700 = vmatpush1.msra.mxu0 0.0
        %1701 = vmatprep.subr.mxu0 0.0
        %1702 = vmatpush1.msra.mxu0 0.0
        %1703 = vmatprep.subr.mxu0 0.0
        %1704 = vmatpush1.msra.mxu0 0.0
        %1705 = vmatprep.subr.mxu0 0.0
        %1706 = vmatpush1.msra.mxu0 0.0
        %1707 = vmatprep.subr.mxu0 0.0
        %1708 = vmatpush1.msra.mxu0 0.0
        %1709 = vmatprep.subr.mxu0 0.0
        %1710 = vmatpush1.msra.mxu0 0.0
        %1711 = vmatprep.mubr.f32.mxu0 0.0
        %1712 = vmatmul.mubr.f32.gmra.mrb[0].mxu0 %v1340
        %v1713 = vpop.f32.mrb[0].mxu0
        %v1714 = vadd.f32 %v1322, %v1713
        %v1715 = vpop.f32.mrb[0].mxu0
        %v1716 = vadd.f32 %v1322, %v1715
        %1717 = vmatprep.mubr.f32.mxu0 0.0
        %1718 = vmatmul.mubr.f32.gmra.mrb[0].mxu0 %v1343
        %v1719 = vpop.f32.mrb[0].mxu0
        %v1720 = vadd.f32 %v1327, %v1719
        %v1721 = vpop.f32.mrb[0].mxu0
        %v1722 = vadd.f32 %v1327, %v1721
        %1723 = vmatprep.mubr.f32.mxu0 0.0
        %1724 = vmatmul.mubr.f32.gmra.mrb[0].mxu0 %v1346
        %v1725 = vpop.f32.mrb[0].mxu0
        %v1726 = vadd.f32 %v1332, %v1725
        %v1727 = vpop.f32.mrb[0].mxu0
        %v1728 = vadd.f32 %v1332, %v1727
        %1729 = vmatprep.mubr.f32.mxu0 0.0
        %1730 = vmatmul.mubr.f32.gmra.mrb[0].mxu0 %v1349
        %v1731 = vpop.f32.mrb[0].mxu0
        %v1732 = vadd.f32 %v1337, %v1731
        %v1733 = vpop.f32.mrb[0].mxu0
        %v1734 = vadd.f32 %v1337, %v1733
        %1735 = vdwg.mxu0
        %v1736 = vtanh.pop %v1714
        %v1737 = vtanh.pop %v1716
        %v1738 = vmul.f32 %v1736, 0.5
        %v1739 = vmul.f32 %v1737, 0.5
        %v1740 = vadd.f32 %v1738, 0.5
        %v1741 = vadd.f32 %v1739, 0.5
        %v1742 = vtanh.pop %v1720
        %v1743 = vtanh.pop %v1722
        %v1744 = vmul.f32 %v1742, 0.5
        %v1745 = vmul.f32 %v1743, 0.5
        %v1746 = vadd.f32 %v1744, 0.5
        %v1747 = vadd.f32 %v1745, 0.5
        %v1748 = vtanh.pop %v1726
        %v1749 = vtanh.pop %v1728
        %v1750 = vtanh.pop %v1732
        %v1751 = vtanh.pop %v1734
        %v1752 = vmul.f32 %v1750, 0.5
        %v1753 = vmul.f32 %v1751, 0.5
        %v1754 = vadd.f32 %v1752, 0.5
        %v1755 = vadd.f32 %v1753, 0.5
        %v1756 = vmul.f32 %v1746, %v1619
        %v1757 = vmul.f32 %v1747, %v1620
        %v1758 = vmul.f32 %v1740, %v1748
        %v1759 = vmul.f32 %v1741, %v1749
        %v1760 = vadd.f32 %v1756, %v1758
        %v1761 = vadd.f32 %v1757, %v1759
        %v1762 = vtanh.pop %v1760
        %v1763 = vtanh.pop %v1761
        %v1764 = vmul.f32 %v1754, %v1762
        %v1765 = vmul.f32 %v1755, %v1763
        %v1766 = vmul.f32 %v1473, %v1764
        %v1767 = vmul.f32 %v1473, %v1765
        %v1768 = vrot.slane %v1766, 4
        %v1769 = vadd.f32 %v1766, %v1768
        %v1770 = vrot.slane %v1769, 2
        %v1771 = vadd.f32 %v1769, %v1770
        %v1772 = vrot.slane %v1771, 1
        %v1773 = vadd.f32 %v1771, %v1772
        %v1774 = vrot.slane %v1767, 4
        %v1775 = vadd.f32 %v1767, %v1774
        %v1776 = vrot.slane %v1775, 2
        %v1777 = vadd.f32 %v1775, %v1776
        %v1778 = vrot.slane %v1777, 1
        %v1779 = vadd.f32 %v1777, %v1778
        %v1780 = vadd.f32 %v1773, %v1497
        %v1781 = vadd.f32 %v1779, %v1497
        %v1782 = vtanh.pop %v1780
        %v1783 = vtanh.pop %v1781
        %v1784 = vmul.f32 %v1782, 0.5
        %v1785 = vmul.f32 %v1783, 0.5
        %v1786 = vadd.f32 %v1784, 0.5
        %v1787 = vadd.f32 %v1785, 0.5
        %vm1788 = vcmask 1040384
        %v1789 = vsel %vm1788, %v1504, %v1645
        %v1790 = vsel %vm1788, %v1505, %v1646
        %vm1791 = vcmask 1041408
        %v1792 = vsel %vm1791, %v1789, %v1786
        %v1793 = vsel %vm1791, %v1790, %v1787
        %v1796 = vcombine.low %v1792, %v1793
        %1798 = vst [vmem:[%s301] sm:$0x77] %v1796
        %s1799 = sand.u32 %s205, 1
        %s1800 = scalar_lea.sflag [#allocation4], %s1799
        %s1801 = sand.u32 %s205, 1
        %s1802 = smul.addr %s1801, 8
        %s1803 = scalar_lea.vmem [#allocation3], %s1802
        // Predicated region
        $region53: #{tpu_custom_call.1} parent=51 // pred_check
          %p1804 = pneg %p215
        $region54: #{tpu_custom_call.1} parent=51 // pred_check_branch
          %1806 = sbr.rel (%p1804) target = $region56
        $region55: #{tpu_custom_call.1} parent=51 // pred_region
          %s1807 = smul.u32 2, %s24
          %s1809 = ssub.s32 128, 128
          %1810 = vsyncadd %s1800, %s1809
          %s1811 = smul.addr %s1807, 64
          %s1812 = scalar_lea.hbm %s8, %s1811
          %s1814 = sshll.u32 %s1803, 4
          %s1815 = int_to_ptr.vmem [resolvable:$true] %s1814
          %1817 = dma.vmem_to_hbm [thread:$0]  %s1815, 128, %s1812, %s1800
        $region56: #{tpu_custom_call.1} parent=51 // pred_fallthru
          _
      $region52: #{tpu_custom_call.1} parent=5 // pred_fallthru
        _
      %p1818 = scmp.le.s32.totalorder 2, %s19
      // Predicated region
      $region57: #{tpu_custom_call.1} parent=5 // pred_check
        %p1819 = pneg %p1818
      $region58: #{tpu_custom_call.1} parent=5 // pred_check_branch
        %1821 = sbr.rel (%p1819) target = $region60
      $region59: #{tpu_custom_call.1} parent=5 // pred_region
        %s1822 = ssub.s32 %s19, 2
        // Predicated region
        $region61: #{tpu_custom_call.1} parent=59 // pred_check
          %p1823 = pneg %p221
        $region62: #{tpu_custom_call.1} parent=59 // pred_check_branch
          %1825 = sbr.rel (%p1823) target = $region64
        $region63: #{tpu_custom_call.1} parent=59 // pred_region
          %s1826 = sand.u32 %s206, 1
          %s1827 = scalar_lea.sflag [#allocation4], %s1826
          %s1828 = sand.u32 %s206, 1
          %s1829 = smul.addr %s1828, 8
          %s1830 = scalar_lea.vmem [#allocation3], %s1829
          %1831 = dma.done %s1827, 128
        $region64: #{tpu_custom_call.1} parent=59 // pred_fallthru
          _
      $region60: #{tpu_custom_call.1} parent=5 // pred_fallthru
        _
    $region6: #{tpu_custom_call.1} parent=1 // loop_footer
      %s23 = sadd.s32 1, %s19
    $region7: #{tpu_custom_call.1} parent=1 // loop_footer_branch
      %18 = sbr.rel target = $region3
    $region8: #{tpu_custom_call.1} parent=1 // loop_exit
      _
    %1832 = vsyncpa [#allocation4], 1
    %s1833 = scalar_lea.sflag [#allocation4], 1
    %1834 = vsyncpa %s1833, 1

</llo_original>
